<compile_context>
chip_gen: v7x
topology: tpu7x:2x2x1
jax: 0.10.0
libtpu: 0.0.40
codegen_flags: <defaults>
</compile_context>

<pallas_src>
import functools

import jax
import jax.numpy as jnp
from jax.experimental import pallas as pl
from jax.experimental.pallas import tpu as pltpu

_EPS = 1e-6  # matches F.cosine_similarity(..., eps=1e-06) in the PyTorch module


def _edge_decoder_kernel(idx0_ref, idx1_ref, tab_ref, wb_ref, out_ref, *,
                         n_src, apply_linear):
    # idx*_ref : (1, TE) int32 edge-endpoint indices for this tile.
    # tab_ref  : (2D, N_src + N_dst) block-diagonal, row-normalized node table (VMEM-resident,
    #            single copy across the whole grid).
    # wb_ref   : (2,) f32 [weight, bias] of the Linear(1, 1) head, in SMEM.
    idx0 = idx0_ref[...]                         # (1, TE)
    idx1 = idx1_ref[...] + jnp.int32(n_src)      # (1, TE), shifted into the dst block
    te = idx0.shape[1]
    d2, n_tot = tab_ref.shape
    d = d2 // 2

    # Single combined 2-hot selection per edge (src hit in rows [0, n_src), dst hit in
    # rows [n_src, n_tot)).  The zero off-diagonal blocks of the table make the two halves
    # of the matmul result independent.
    node_iota = jax.lax.broadcasted_iota(jnp.int32, (n_tot, te), 0)
    sel = ((node_iota == idx0) | (node_iota == idx1)).astype(jnp.float32)   # (Ntot, TE)

    # Fused gather on the MXU: ab[:d] = srcT[:, idx0], ab[d:] = dstT[:, idx1].
    # precision=HIGHEST keeps the f32 gather exact on bf16-native MXUs (v6e/v7x).
    ab = jax.lax.dot_general(
        tab_ref[...], sel,
        dimension_numbers=(((1,), (0,)), ((), ())),
        preferred_element_type=jnp.float32,
        precision=jax.lax.Precision.HIGHEST)                                # (2D, TE)

    # Tables are pre-normalized, so cosine similarity is just the dot product.
    sim = jnp.sum(ab[:d, :] * ab[d:, :], axis=0, keepdims=True)             # (1, TE)

    if apply_linear:
        sim = sim * wb_ref[0] + wb_ref[1]        # Linear(1, 1): scalar weight & bias from SMEM
    out_ref[...] = sim                           # lane-dense (1, TE) store


def _num_tensorcores():
    # Heuristic: v7x has 2 TensorCores per chip; v5e/v6e have 1.
    try:
        kind = jax.devices()[0].device_kind.lower()
        return 2 if "v7" in kind else 1
    except Exception:
        return 1


def _choose_tile(E, n_tot, d2, *, num_cores, max_te=2048, vmem_budget=16 << 20):
    """Edge-tile width: multiple of 128, as large as the per-step VMEM budget allows
    (sel (Ntot,TE) + ab (2D,TE) live f32 bytes), capped so v7x's 32 MiB scoped VMEM is safe.
    Split into >= 2 grid steps only when 2 TensorCores are available (v7x)."""
    lanes = 128
    e_pad = pl.cdiv(E, lanes) * lanes
    per_col_bytes = (n_tot + d2 + 8) * 4
    te_cap = max(lanes, (vmem_budget // per_col_bytes) // lanes * lanes)
    te = min(max_te, te_cap, e_pad)
    if num_cores >= 2 and e_pad >= 2 * lanes:
        te = min(te, max(lanes, (e_pad // (2 * lanes)) * lanes))
    return te


def _prep_block_diag_table(src, dst):
    """Pre-normalize rows (torch max(||x||, eps) semantics) and build the block-diagonal,
    transposed table [[srcT, 0], [0, dstT]] of shape (2D, N_src + N_dst).  Plain JAX, O(N*D)."""
    def normalize(z):
        z = z.astype(jnp.float32)
        n = jnp.maximum(jnp.sqrt(jnp.sum(z * z, axis=-1, keepdims=True)), jnp.float32(_EPS))
        return z / n

    srcT = normalize(src).T                     # (D, N_src)
    dstT = normalize(dst).T                     # (D, N_dst)
    d, n_src = srcT.shape
    _, n_dst = dstT.shape
    tab = jnp.zeros((2 * d, n_src + n_dst), jnp.float32)
    tab = tab.at[:d, :n_src].set(srcT)
    tab = tab.at[d:, n_src:].set(dstT)
    return tab, n_src, n_dst


def _edge_scores_pallas(tab, n_src, row_0, row_1, wb, apply_linear):
    d2, n_tot = tab.shape
    E = row_0.shape[0]

    TE = _choose_tile(E, n_tot, d2, num_cores=_num_tensorcores())
    E_pad = pl.cdiv(E, TE) * TE
    pad = E_pad - E
    idx0 = jnp.pad(row_0.astype(jnp.int32), (0, pad)).reshape(1, E_pad)
    idx1 = jnp.pad(row_1.astype(jnp.int32), (0, pad)).reshape(1, E_pad)

    kernel = functools.partial(_edge_decoder_kernel, n_src=n_src, apply_linear=apply_linear)
    out = pl.pallas_call(
        kernel,
        out_shape=jax.ShapeDtypeStruct((1, E_pad), jnp.float32),
        grid=(E_pad // TE,),
        in_specs=[
            pl.BlockSpec((1, TE), lambda i: (0, i)),                  # src edge indices
            pl.BlockSpec((1, TE), lambda i: (0, i)),                  # dst edge indices
            pl.BlockSpec(memory_space=pltpu.MemorySpace.VMEM),        # block-diag table, 1 VMEM copy
            pl.BlockSpec(memory_space=pltpu.MemorySpace.SMEM),        # (w, b) scalars
        ],
        out_specs=pl.BlockSpec((1, TE), lambda i: (0, i)),            # lane-dense output slab
        compiler_params=pltpu.CompilerParams(
            dimension_semantics=("parallel",),
            vmem_limit_bytes=32 * 1024 * 1024),
    )(idx0, idx1, tab, wb)
    return out[0, :E]


_TYPE_TO_KEYS = {
    1: ("drug", "adr"),
    2: ("gene", "drug"),
    3: ("disease", "dp"),
    4: ("gene", "disease"),
    5: ("gene", "gene"),
}


def edge_decoder_forward(z_dict, edge_label_index, type, params, apply_linear=False):
    """JAX/Pallas equivalent of EdgeDecoder.forward."""
    if type not in _TYPE_TO_KEYS:
        print("type must be <= 5")
        return None
    src_key, dst_key = _TYPE_TO_KEYS[type]
    row_0, row_1 = edge_label_index
    tab, n_src, _ = _prep_block_diag_table(z_dict[src_key], z_dict[dst_key])
    out = _edge_scores_pallas(tab, n_src, row_0, row_1, params, apply_linear)
    # PyTorch: y.squeeze() if apply_linear else sim -- both are 1-D (E,) here.
    return out


def _reference(z_dict, edge_label_index, type, params, apply_linear):
    src_key, dst_key = _TYPE_TO_KEYS[type]
    row_0, row_1 = edge_label_index
    a = z_dict[src_key][row_0]
    b = z_dict[dst_key][row_1]
    na = jnp.maximum(jnp.linalg.norm(a, axis=-1), _EPS)
    nb = jnp.maximum(jnp.linalg.norm(b, axis=-1), _EPS)
    sim = jnp.sum(a * b, axis=-1) / (na * nb)
    if apply_linear:
        return sim * params[0] + params[1]
    return sim


if __name__ == "__main__":
    key = jax.random.PRNGKey(0)
    D = 32          # hidden embedding dim
    E = 256         # number of edges to score
    n_nodes = 64    # nodes per type

    keys = jax.random.split(key, 8)
    z_dict = {
        "drug":    jax.random.normal(keys[0], (n_nodes, D), jnp.float32),
        "adr":     jax.random.normal(keys[1], (n_nodes, D), jnp.float32),
        "gene":    jax.random.normal(keys[2], (n_nodes, D), jnp.float32),
        "disease": jax.random.normal(keys[3], (n_nodes, D), jnp.float32),
        "dp":      jax.random.normal(keys[4], (n_nodes, D), jnp.float32),
    }
    edge_label_index = jax.random.randint(keys[5], (2, E), 0, n_nodes, jnp.int32)

    # Linear(1, 1) params, torch-style init: uniform(-1/sqrt(fan_in), 1/sqrt(fan_in)), fan_in=1.
    w = jax.random.uniform(keys[6], (), jnp.float32, -1.0, 1.0)
    bias = jax.random.uniform(keys[7], (), jnp.float32, -1.0, 1.0)
    params = jnp.stack([w, bias])   # (2,) SMEM scalars

    # type=1 without the linear head (returns cosine similarity directly).
    sim = edge_decoder_forward(z_dict, edge_label_index, type=1, params=params,
                               apply_linear=False)
    jax.block_until_ready(sim)

    # type=4 with the linear head (returns w*sim + b, squeezed to (E,)).
    y = edge_decoder_forward(z_dict, edge_label_index, type=4, params=params,
                             apply_linear=True)
    jax.block_until_ready(y)

    # sanity check against a pure-JAX reference
    ref_sim = _reference(z_dict, edge_label_index, 1, params, False)
    ref_y = _reference(z_dict, edge_label_index, 4, params, True)
    assert jnp.allclose(sim, ref_sim, atol=1e-5, rtol=1e-5)
    assert jnp.allclose(y, ref_y, atol=1e-5, rtol=1e-5)

    print("KERNEL_OK")
</pallas_src>

<mosaic_0001>
module attributes {stable_mosaic.version = 11 : i64} {
  func.func @_edge_decoder_kernel(%arg0: i32, %arg1: memref<1x256xi32, #tpu.memory_space<vmem>>, %arg2: memref<1x256xi32, #tpu.memory_space<vmem>>, %arg3: memref<64x128xf32, #tpu.memory_space<vmem>>, %arg4: memref<2xf32, #tpu.memory_space<smem>>, %arg5: memref<1x256xf32, #tpu.memory_space<vmem>>) attributes {dimension_semantics = [#tpu.dimension_semantics<parallel>], iteration_bounds = array<i64: 1>, scalar_prefetch = 0 : i64, scratch_operands = 0 : i64, tpu.core_type = #tpu.core_type<tc>, window_params = [{transform_indices = @transform_0, window_bounds = array<i64: 1, 256>}, {transform_indices = @transform_1, window_bounds = array<i64: 1, 256>}, {pipeline_mode = #tpu.pipeline_mode<synchronous>, transform_indices = @transform_2, window_bounds = array<i64: 64, 128>}, {transform_indices = @transform_3, window_bounds = array<i64: 2>}, {transform_indices = @transform_4, window_bounds = array<i64: 1, 256>}]} {
    %c0 = arith.constant 0 : index
    %c0_0 = arith.constant 0 : index
    %0 = vector.load %arg1[%c0, %c0_0] : memref<1x256xi32, #tpu.memory_space<vmem>>, vector<1x256xi32>
    %c0_1 = arith.constant 0 : index
    %c0_2 = arith.constant 0 : index
    %1 = vector.load %arg2[%c0_1, %c0_2] : memref<1x256xi32, #tpu.memory_space<vmem>>, vector<1x256xi32>
    %c64_i32 = arith.constant 64 : i32
    %2 = vector.broadcast %c64_i32 : i32 to vector<1x256xi32>
    %3 = arith.addi %1, %2 : vector<1x256xi32>
    %4 = tpu.iota {dimensions = array<i32: 0>} : vector<128x256xi32>
    %5 = vector.broadcast %0 : vector<1x256xi32> to vector<128x256xi32>
    %6 = arith.cmpi eq, %4, %5 : vector<128x256xi32>
    %7 = vector.broadcast %3 : vector<1x256xi32> to vector<128x256xi32>
    %8 = arith.cmpi eq, %4, %7 : vector<128x256xi32>
    %9 = arith.ori %6, %8 : vector<128x256xi1>
    %10 = arith.extui %9 : vector<128x256xi1> to vector<128x256xi32>
    %11 = arith.sitofp %10 : vector<128x256xi32> to vector<128x256xf32>
    %c0_3 = arith.constant 0 : index
    %c0_4 = arith.constant 0 : index
    %12 = vector.load %arg3[%c0_3, %c0_4] : memref<64x128xf32, #tpu.memory_space<vmem>>, vector<64x128xf32>
    %cst = arith.constant dense<0.000000e+00> : vector<64x256xf32>
    %13 = tpu.matmul %12, %11, %cst {dimension_numbers = #tpu.dot_dimension_numbers<[1], [0], [0], [1], [0, 0, 1, 1], [], []>, precision = #tpu.contract_precision<fp32>} : vector<64x128xf32>, vector<128x256xf32>, vector<64x256xf32> -> vector<64x256xf32>
    %14 = vector.extract_strided_slice %13 {offsets = [0, 0], sizes = [32, 256], strides = [1, 1]} : vector<64x256xf32> to vector<32x256xf32>
    %15 = vector.extract_strided_slice %13 {offsets = [32, 0], sizes = [32, 256], strides = [1, 1]} : vector<64x256xf32> to vector<32x256xf32>
    %16 = arith.mulf %14, %15 : vector<32x256xf32>
    %cst_5 = arith.constant dense<0.000000e+00> : vector<256xf32>
    %17 = vector.multi_reduction <add>, %16, %cst_5 [0] : vector<32x256xf32> to vector<256xf32>
    %18 = vector.shape_cast %17 : vector<256xf32> to vector<1x256xf32>
    %c0_6 = arith.constant 0 : index
    %c0_7 = arith.constant 0 : index
    %19 = vector.load %arg5[%c0_6, %c0_7] : memref<1x256xf32, #tpu.memory_space<vmem>>, vector<1x256xf32>
    tpu.vector_store %arg5[%c0_6, %c0_7], %18 {strides = array<i32>} : memref<1x256xf32, #tpu.memory_space<vmem>>, vector<1x256xf32>,
    return
  }
  func.func @transform_0(%arg0: i32) -> (i32, i32) {
    %c0_i32 = arith.constant 0 : i32
    %c0_i32_0 = arith.constant 0 : i32
    return %c0_i32, %arg0 : i32, i32
  }
  func.func @transform_1(%arg0: i32) -> (i32, i32) {
    %c0_i32 = arith.constant 0 : i32
    %c0_i32_0 = arith.constant 0 : i32
    return %c0_i32, %arg0 : i32, i32
  }
  func.func @transform_2(%arg0: i32) -> (i32, i32) {
    %c0_i32 = arith.constant 0 : i32
    %c0_i32_0 = arith.constant 0 : i32
    %c0_i32_1 = arith.constant 0 : i32
    return %c0_i32, %c0_i32_0 : i32, i32
  }
  func.func @transform_3(%arg0: i32) -> i32 {
    %c0_i32 = arith.constant 0 : i32
    %c0_i32_0 = arith.constant 0 : i32
    return %c0_i32 : i32
  }
  func.func @transform_4(%arg0: i32) -> (i32, i32) {
    %c0_i32 = arith.constant 0 : i32
    %c0_i32_0 = arith.constant 0 : i32
    return %c0_i32, %arg0 : i32, i32
  }
}

</mosaic_0001>

<llo_original>
// kernel: tpu_custom_call.1
$region0: #{tpu_custom_call.1}
  #allocation0 [shape = 'u32[]', space=smem, size = 0x4, offset = 0x4, fixed_abs, tag = 'smem constant byte address 0x4 - core index']
  #allocation1 [shape = 'u32[144,128]{1,0:T(1,128)}', space=vmem, size = 0x12000, scoped, tag = 'internal scratch']
  %s0 = inlined_call_operand.hbm [shape: s32[1,256], index: 0, kind: input, shape index: {}]
  %s1 = inlined_call_operand.vmem [shape: s32[1,256], index: 1, kind: input, shape index: {}]
  %s2 = inlined_call_operand.hbm [shape: f32[64,128], index: 2, kind: input, shape index: {}]
  %s3 = inlined_call_operand.vmem [shape: f32[2], index: 3, kind: input, shape index: {}]
  %s4 = inlined_call_operand.hbm [shape: f32[1,256], index: 4, kind: output, shape index: {}]
  %s5 = sld [smem:[#allocation0]]
  $region38: #{tpu_custom_call.1} parent=0
    _
  %s7 = ssub.s32 1, %s5
  %s8 = scalar_select 0, %s7, %s5
  $region1: #{tpu_custom_call.1} parent=0
    #allocation2 [shape = 'u8[1024]{0}', space=vmem, size = 0x400, scoped, tag = 'input window, operand 0, single buffered']
    #allocation3 [shape = 's32[1]{0}', space=sflag, size = 0x4, scoped, tag = 'scoped memory for tpu_custom_call.1']
    #allocation4 [shape = 's32[1]{0}', space=sflag, size = 0x4, scoped, tag = 'scoped memory for tpu_custom_call.1']
    #allocation5 [shape = 's32[1]{0}', space=sflag, size = 0x4, scoped, tag = 'scoped memory for tpu_custom_call.1']
    #allocation6 [shape = 'u8[32768]{0}', space=vmem, size = 0x8000, scoped, tag = 'input window, operand 2, single buffered']
    #allocation7 [shape = 's32[1]{0}', space=sflag, size = 0x4, scoped, tag = 'scoped memory for tpu_custom_call.1']
    #allocation8 [shape = 'u8[512]{0}', space=smem, size = 0x200, scoped, tag = 'input window, operand 3, single buffered']
    #allocation9 [shape = 'u8[1024]{0}', space=vmem, size = 0x400, scoped, tag = 'output window, operand 0, single buffered']
    %9 = vsyncpa [#allocation3], 0
    %10 = vsyncpa [#allocation7], 0
    %11 = vsyncpa [#allocation5], 0
    %12 = vsyncpa [#allocation4], 0
    // Predicated region
    $region2: #{tpu_custom_call.1} parent=1 // pred_check
      _
    $region3: #{tpu_custom_call.1} parent=1 // pred_check_branch
      %14 = sbr.rel (0) target = $region5
    $region4: #{tpu_custom_call.1} parent=1 // pred_region
      %s16 = ssub.s32 32, 32
      %17 = vsyncadd [#allocation3], %s16
      %s19 = sshll.u32 [#allocation2], 4
      %s20 = int_to_ptr.vmem [resolvable:$true] %s19
      %22 = dma.hbm_to_vmem [thread:$0]  %s0, 32, %s20, [#allocation3]
    $region5: #{tpu_custom_call.1} parent=1 // pred_fallthru
      _
    // Predicated region
    $region6: #{tpu_custom_call.1} parent=1 // pred_check
      _
    $region7: #{tpu_custom_call.1} parent=1 // pred_check_branch
      %24 = sbr.rel (0) target = $region9
    $region8: #{tpu_custom_call.1} parent=1 // pred_region
      _
    $region9: #{tpu_custom_call.1} parent=1 // pred_fallthru
      _
    // Predicated region
    $region10: #{tpu_custom_call.1} parent=1 // pred_check
      _
    $region11: #{tpu_custom_call.1} parent=1 // pred_check_branch
      %26 = sbr.rel (0) target = $region13
    $region12: #{tpu_custom_call.1} parent=1 // pred_region
      %s28 = ssub.s32 1024, 1024
      %29 = vsyncadd [#allocation7], %s28
      %s30 = sshll.u32 [#allocation6], 4
      %s31 = int_to_ptr.vmem [resolvable:$true] %s30
      %36 = dma.hbm_to_vmem [thread:$0]  %s2, 1024, %s31, [#allocation7], 128, 128, 8
    $region13: #{tpu_custom_call.1} parent=1 // pred_fallthru
      _
    // Predicated region
    $region14: #{tpu_custom_call.1} parent=1 // pred_check
      _
    $region15: #{tpu_custom_call.1} parent=1 // pred_check_branch
      %38 = sbr.rel (0) target = $region17
    $region16: #{tpu_custom_call.1} parent=1 // pred_region
      %s40 = ssub.s32 16, 16
      %41 = vsyncadd [#allocation5], %s40
      %s43 = sshll.u32 %s3, 4
      %s44 = int_to_ptr.vmem [resolvable:$true] %s43
      %46 = dma.vmem_to_smem %s44, 16, [#allocation8], [#allocation5]
    $region17: #{tpu_custom_call.1} parent=1 // pred_fallthru
      _
    // Predicated region
    $region18: #{tpu_custom_call.1} parent=1 // pred_check
      _
    $region19: #{tpu_custom_call.1} parent=1 // pred_check_branch
      %48 = sbr.rel (0) target = $region21
    $region20: #{tpu_custom_call.1} parent=1 // pred_region
      %49 = dma.done [#allocation3], 32
    $region21: #{tpu_custom_call.1} parent=1 // pred_fallthru
      _
    // Predicated region
    $region22: #{tpu_custom_call.1} parent=1 // pred_check
      _
    $region23: #{tpu_custom_call.1} parent=1 // pred_check_branch
      %51 = sbr.rel (0) target = $region25
    $region24: #{tpu_custom_call.1} parent=1 // pred_region
      %52 = dma.done [#allocation7], 1024
    $region25: #{tpu_custom_call.1} parent=1 // pred_fallthru
      _
    // Predicated region
    $region26: #{tpu_custom_call.1} parent=1 // pred_check
      _
    $region27: #{tpu_custom_call.1} parent=1 // pred_check_branch
      %54 = sbr.rel (0) target = $region29
    $region28: #{tpu_custom_call.1} parent=1 // pred_region
      %55 = dma.done [#allocation5], 16
    $region29: #{tpu_custom_call.1} parent=1 // pred_fallthru
      _
    %56 = sfence
    %v57 = vld [vmem:[#allocation2] sm:$0x3]
    %v58 = vld [vmem:[%s1] sm:$0x3]
    %v59 = vadd.s32 %v58, 64
    %v60 = vlaneseq
    %v61 = vshrl.u32 %v60, 7
    %v62 = vadd.s32 %v61, 8
    %v63 = vadd.s32 %v61, 16
    %v64 = vadd.s32 %v61, 24
    %v65 = vadd.s32 %v61, 32
    %v66 = vadd.s32 %v61, 40
    %v67 = vadd.s32 %v61, 48
    %v68 = vadd.s32 %v61, 56
    %v69 = vadd.s32 %v61, 64
    %v70 = vadd.s32 %v61, 72
    %v71 = vadd.s32 %v61, 80
    %v72 = vadd.s32 %v61, 88
    %v73 = vadd.s32 %v61, 96
    %v74 = vadd.s32 %v61, 104
    %v75 = vadd.s32 %v61, 112
    %v76 = vadd.s32 %v61, 120
    %v77 = vlaneseq
    %v78 = vshrl.u32 %v77, 7
    %v79 = vsub.s32 0, %v78
    %v80 = vrot.slane %v57, %v79
    %v81 = vlaneseq
    %v82 = vshrl.u32 %v81, 7
    %v83 = vsub.s32 1, %v82
    %v84 = vrot.slane %v57, %v83
    %vm85 = vcmp.eq.s32.totalorder %v61, %v80
    %vm86 = vcmp.eq.s32.totalorder %v61, %v84
    %vm87 = vcmp.eq.s32.totalorder %v62, %v80
    %vm88 = vcmp.eq.s32.totalorder %v62, %v84
    %vm89 = vcmp.eq.s32.totalorder %v63, %v80
    %vm90 = vcmp.eq.s32.totalorder %v63, %v84
    %vm91 = vcmp.eq.s32.totalorder %v64, %v80
    %vm92 = vcmp.eq.s32.totalorder %v64, %v84
    %vm93 = vcmp.eq.s32.totalorder %v65, %v80
    %vm94 = vcmp.eq.s32.totalorder %v65, %v84
    %vm95 = vcmp.eq.s32.totalorder %v66, %v80
    %vm96 = vcmp.eq.s32.totalorder %v66, %v84
    %vm97 = vcmp.eq.s32.totalorder %v67, %v80
    %vm98 = vcmp.eq.s32.totalorder %v67, %v84
    %vm99 = vcmp.eq.s32.totalorder %v68, %v80
    %vm100 = vcmp.eq.s32.totalorder %v68, %v84
    %vm101 = vcmp.eq.s32.totalorder %v69, %v80
    %vm102 = vcmp.eq.s32.totalorder %v69, %v84
    %vm103 = vcmp.eq.s32.totalorder %v70, %v80
    %vm104 = vcmp.eq.s32.totalorder %v70, %v84
    %vm105 = vcmp.eq.s32.totalorder %v71, %v80
    %vm106 = vcmp.eq.s32.totalorder %v71, %v84
    %vm107 = vcmp.eq.s32.totalorder %v72, %v80
    %vm108 = vcmp.eq.s32.totalorder %v72, %v84
    %vm109 = vcmp.eq.s32.totalorder %v73, %v80
    %vm110 = vcmp.eq.s32.totalorder %v73, %v84
    %vm111 = vcmp.eq.s32.totalorder %v74, %v80
    %vm112 = vcmp.eq.s32.totalorder %v74, %v84
    %vm113 = vcmp.eq.s32.totalorder %v75, %v80
    %vm114 = vcmp.eq.s32.totalorder %v75, %v84
    %vm115 = vcmp.eq.s32.totalorder %v76, %v80
    %vm116 = vcmp.eq.s32.totalorder %v76, %v84
    %v117 = vlaneseq
    %v118 = vshrl.u32 %v117, 7
    %v119 = vsub.s32 0, %v118
    %v120 = vrot.slane %v59, %v119
    %v121 = vlaneseq
    %v122 = vshrl.u32 %v121, 7
    %v123 = vsub.s32 1, %v122
    %v124 = vrot.slane %v59, %v123
    %vm125 = vcmp.eq.s32.totalorder %v61, %v120
    %vm126 = vcmp.eq.s32.totalorder %v61, %v124
    %vm127 = vcmp.eq.s32.totalorder %v62, %v120
    %vm128 = vcmp.eq.s32.totalorder %v62, %v124
    %vm129 = vcmp.eq.s32.totalorder %v63, %v120
    %vm130 = vcmp.eq.s32.totalorder %v63, %v124
    %vm131 = vcmp.eq.s32.totalorder %v64, %v120
    %vm132 = vcmp.eq.s32.totalorder %v64, %v124
    %vm133 = vcmp.eq.s32.totalorder %v65, %v120
    %vm134 = vcmp.eq.s32.totalorder %v65, %v124
    %vm135 = vcmp.eq.s32.totalorder %v66, %v120
    %vm136 = vcmp.eq.s32.totalorder %v66, %v124
    %vm137 = vcmp.eq.s32.totalorder %v67, %v120
    %vm138 = vcmp.eq.s32.totalorder %v67, %v124
    %vm139 = vcmp.eq.s32.totalorder %v68, %v120
    %vm140 = vcmp.eq.s32.totalorder %v68, %v124
    %vm141 = vcmp.eq.s32.totalorder %v69, %v120
    %vm142 = vcmp.eq.s32.totalorder %v69, %v124
    %vm143 = vcmp.eq.s32.totalorder %v70, %v120
    %vm144 = vcmp.eq.s32.totalorder %v70, %v124
    %vm145 = vcmp.eq.s32.totalorder %v71, %v120
    %vm146 = vcmp.eq.s32.totalorder %v71, %v124
    %vm147 = vcmp.eq.s32.totalorder %v72, %v120
    %vm148 = vcmp.eq.s32.totalorder %v72, %v124
    %vm149 = vcmp.eq.s32.totalorder %v73, %v120
    %vm150 = vcmp.eq.s32.totalorder %v73, %v124
    %vm151 = vcmp.eq.s32.totalorder %v74, %v120
    %vm152 = vcmp.eq.s32.totalorder %v74, %v124
    %vm153 = vcmp.eq.s32.totalorder %v75, %v120
    %vm154 = vcmp.eq.s32.totalorder %v75, %v124
    %vm155 = vcmp.eq.s32.totalorder %v76, %v120
    %vm156 = vcmp.eq.s32.totalorder %v76, %v124
    %vm157 = vmor %vm85, %vm125
    %vm158 = vmor %vm86, %vm126
    %vm159 = vmor %vm87, %vm127
    %vm160 = vmor %vm88, %vm128
    %vm161 = vmor %vm89, %vm129
    %vm162 = vmor %vm90, %vm130
    %vm163 = vmor %vm91, %vm131
    %vm164 = vmor %vm92, %vm132
    %vm165 = vmor %vm93, %vm133
    %vm166 = vmor %vm94, %vm134
    %vm167 = vmor %vm95, %vm135
    %vm168 = vmor %vm96, %vm136
    %vm169 = vmor %vm97, %vm137
    %vm170 = vmor %vm98, %vm138
    %vm171 = vmor %vm99, %vm139
    %vm172 = vmor %vm100, %vm140
    %vm173 = vmor %vm101, %vm141
    %vm174 = vmor %vm102, %vm142
    %vm175 = vmor %vm103, %vm143
    %vm176 = vmor %vm104, %vm144
    %vm177 = vmor %vm105, %vm145
    %vm178 = vmor %vm106, %vm146
    %vm179 = vmor %vm107, %vm147
    %vm180 = vmor %vm108, %vm148
    %vm181 = vmor %vm109, %vm149
    %vm182 = vmor %vm110, %vm150
    %vm183 = vmor %vm111, %vm151
    %vm184 = vmor %vm112, %vm152
    %vm185 = vmor %vm113, %vm153
    %vm186 = vmor %vm114, %vm154
    %vm187 = vmor %vm115, %vm155
    %vm188 = vmor %vm116, %vm156
    %v189 = vsel %vm157, 1, 0
    %v190 = vsel %vm158, 1, 0
    %v191 = vsel %vm159, 1, 0
    %v192 = vsel %vm160, 1, 0
    %v193 = vsel %vm161, 1, 0
    %v194 = vsel %vm162, 1, 0
    %v195 = vsel %vm163, 1, 0
    %v196 = vsel %vm164, 1, 0
    %v197 = vsel %vm165, 1, 0
    %v198 = vsel %vm166, 1, 0
    %v199 = vsel %vm167, 1, 0
    %v200 = vsel %vm168, 1, 0
    %v201 = vsel %vm169, 1, 0
    %v202 = vsel %vm170, 1, 0
    %v203 = vsel %vm171, 1, 0
    %v204 = vsel %vm172, 1, 0
    %v205 = vsel %vm173, 1, 0
    %v206 = vsel %vm174, 1, 0
    %v207 = vsel %vm175, 1, 0
    %v208 = vsel %vm176, 1, 0
    %v209 = vsel %vm177, 1, 0
    %v210 = vsel %vm178, 1, 0
    %v211 = vsel %vm179, 1, 0
    %v212 = vsel %vm180, 1, 0
    %v213 = vsel %vm181, 1, 0
    %v214 = vsel %vm182, 1, 0
    %v215 = vsel %vm183, 1, 0
    %v216 = vsel %vm184, 1, 0
    %v217 = vsel %vm185, 1, 0
    %v218 = vsel %vm186, 1, 0
    %v219 = vsel %vm187, 1, 0
    %v220 = vsel %vm188, 1, 0
    %v221 = vcvt.s32.f32 %v189
    %v222 = vcvt.s32.f32 %v190
    %v223 = vcvt.s32.f32 %v191
    %v224 = vcvt.s32.f32 %v192
    %v225 = vcvt.s32.f32 %v193
    %v226 = vcvt.s32.f32 %v194
    %v227 = vcvt.s32.f32 %v195
    %v228 = vcvt.s32.f32 %v196
    %v229 = vcvt.s32.f32 %v197
    %v230 = vcvt.s32.f32 %v198
    %v231 = vcvt.s32.f32 %v199
    %v232 = vcvt.s32.f32 %v200
    %v233 = vcvt.s32.f32 %v201
    %v234 = vcvt.s32.f32 %v202
    %v235 = vcvt.s32.f32 %v203
    %v236 = vcvt.s32.f32 %v204
    %v237 = vcvt.s32.f32 %v205
    %v238 = vcvt.s32.f32 %v206
    %v239 = vcvt.s32.f32 %v207
    %v240 = vcvt.s32.f32 %v208
    %v241 = vcvt.s32.f32 %v209
    %v242 = vcvt.s32.f32 %v210
    %v243 = vcvt.s32.f32 %v211
    %v244 = vcvt.s32.f32 %v212
    %v245 = vcvt.s32.f32 %v213
    %v246 = vcvt.s32.f32 %v214
    %v247 = vcvt.s32.f32 %v215
    %v248 = vcvt.s32.f32 %v216
    %v249 = vcvt.s32.f32 %v217
    %v250 = vcvt.s32.f32 %v218
    %v251 = vcvt.s32.f32 %v219
    %v252 = vcvt.s32.f32 %v220
    %v253 = vld [vmem:[#allocation6] sm:$0xff]
    %v254 = vld [vmem:[#allocation6 + $0x8] sm:$0xff]
    %v255 = vld [vmem:[#allocation6 + $0x10] sm:$0xff]
    %v256 = vld [vmem:[#allocation6 + $0x18] sm:$0xff]
    %v257 = vld [vmem:[#allocation6 + $0x20] sm:$0xff]
    %v258 = vld [vmem:[#allocation6 + $0x28] sm:$0xff]
    %v259 = vld [vmem:[#allocation6 + $0x30] sm:$0xff]
    %v260 = vld [vmem:[#allocation6 + $0x38] sm:$0xff]
    %v261 = vand.u32 %v222, 4294901760
    %262 = vmatprep.subr.mxu0 %v261
    %v263 = vand.u32 %v221, 4294901760
    %264 = vmatpush1.msra.mxu0 %v263
    %v265 = vand.u32 %v224, 4294901760
    %266 = vmatprep.subr.mxu0 %v265
    %v267 = vand.u32 %v223, 4294901760
    %268 = vmatpush1.msra.mxu0 %v267
    %v269 = vand.u32 %v226, 4294901760
    %270 = vmatprep.subr.mxu0 %v269
    %v271 = vand.u32 %v225, 4294901760
    %272 = vmatpush1.msra.mxu0 %v271
    %v273 = vand.u32 %v228, 4294901760
    %274 = vmatprep.subr.mxu0 %v273
    %v275 = vand.u32 %v227, 4294901760
    %276 = vmatpush1.msra.mxu0 %v275
    %v277 = vand.u32 %v230, 4294901760
    %278 = vmatprep.subr.mxu0 %v277
    %v279 = vand.u32 %v229, 4294901760
    %280 = vmatpush1.msra.mxu0 %v279
    %v281 = vand.u32 %v232, 4294901760
    %282 = vmatprep.subr.mxu0 %v281
    %v283 = vand.u32 %v231, 4294901760
    %284 = vmatpush1.msra.mxu0 %v283
    %v285 = vand.u32 %v234, 4294901760
    %286 = vmatprep.subr.mxu0 %v285
    %v287 = vand.u32 %v233, 4294901760
    %288 = vmatpush1.msra.mxu0 %v287
    %v289 = vand.u32 %v236, 4294901760
    %290 = vmatprep.subr.mxu0 %v289
    %v291 = vand.u32 %v235, 4294901760
    %292 = vmatpush1.msra.mxu0 %v291
    %v293 = vand.u32 %v238, 4294901760
    %294 = vmatprep.subr.mxu0 %v293
    %v295 = vand.u32 %v237, 4294901760
    %296 = vmatpush1.msra.mxu0 %v295
    %v297 = vand.u32 %v240, 4294901760
    %298 = vmatprep.subr.mxu0 %v297
    %v299 = vand.u32 %v239, 4294901760
    %300 = vmatpush1.msra.mxu0 %v299
    %v301 = vand.u32 %v242, 4294901760
    %302 = vmatprep.subr.mxu0 %v301
    %v303 = vand.u32 %v241, 4294901760
    %304 = vmatpush1.msra.mxu0 %v303
    %v305 = vand.u32 %v244, 4294901760
    %306 = vmatprep.subr.mxu0 %v305
    %v307 = vand.u32 %v243, 4294901760
    %308 = vmatpush1.msra.mxu0 %v307
    %v309 = vand.u32 %v246, 4294901760
    %310 = vmatprep.subr.mxu0 %v309
    %v311 = vand.u32 %v245, 4294901760
    %312 = vmatpush1.msra.mxu0 %v311
    %v313 = vand.u32 %v248, 4294901760
    %314 = vmatprep.subr.mxu0 %v313
    %v315 = vand.u32 %v247, 4294901760
    %316 = vmatpush1.msra.mxu0 %v315
    %v317 = vand.u32 %v250, 4294901760
    %318 = vmatprep.subr.mxu0 %v317
    %v319 = vand.u32 %v249, 4294901760
    %320 = vmatpush1.msra.mxu0 %v319
    %v321 = vand.u32 %v252, 4294901760
    %322 = vmatprep.subr.mxu0 %v321
    %v323 = vand.u32 %v251, 4294901760
    %324 = vmatpush1.msra.mxu0 %v323
    %325 = vmatprep.subr.mxu0 0.0
    %326 = vmatpush1.msra.mxu0 0.0
    %327 = vmatprep.subr.mxu0 0.0
    %328 = vmatpush1.msra.mxu0 0.0
    %329 = vmatprep.subr.mxu0 0.0
    %330 = vmatpush1.msra.mxu0 0.0
    %331 = vmatprep.subr.mxu0 0.0
    %332 = vmatpush1.msra.mxu0 0.0
    %333 = vmatprep.subr.mxu0 0.0
    %334 = vmatpush1.msra.mxu0 0.0
    %335 = vmatprep.subr.mxu0 0.0
    %336 = vmatpush1.msra.mxu0 0.0
    %337 = vmatprep.subr.mxu0 0.0
    %338 = vmatpush1.msra.mxu0 0.0
    %339 = vmatprep.subr.mxu0 0.0
    %340 = vmatpush1.msra.mxu0 0.0
    %341 = vmatprep.subr.mxu0 0.0
    %342 = vmatpush1.msra.mxu0 0.0
    %343 = vmatprep.subr.mxu0 0.0
    %344 = vmatpush1.msra.mxu0 0.0
    %345 = vmatprep.subr.mxu0 0.0
    %346 = vmatpush1.msra.mxu0 0.0
    %347 = vmatprep.subr.mxu0 0.0
    %348 = vmatpush1.msra.mxu0 0.0
    %349 = vmatprep.subr.mxu0 0.0
    %350 = vmatpush1.msra.mxu0 0.0
    %351 = vmatprep.subr.mxu0 0.0
    %352 = vmatpush1.msra.mxu0 0.0
    %353 = vmatprep.subr.mxu0 0.0
    %354 = vmatpush1.msra.mxu0 0.0
    %355 = vmatprep.subr.mxu0 0.0
    %356 = vmatpush1.msra.mxu0 0.0
    %357 = vmatprep.mubr.f32.mxu0 0.0
    %v358 = vand.u32 %v253, 4294901760
    %v359 = vsub.f32 %v253, %v358
    %v360 = vand.u32 %v359, 4294901760
    %v361 = vsub.f32 %v359, %v360
    %v362 = vand.u32 %v361, 4294901760
    %363 = vmatmul.mubr.f32.gmra.mrb[0].mxu0 %v362
    %v364 = vpop.f32.mrb[0].mxu0
    %v365 = vadd.f32 0.0, %v364
    %v366 = vpop.f32.mrb[0].mxu0
    %v367 = vadd.f32 0.0, %v366
    %368 = vmatprep.mubr.f32.mxu0 0.0
    %v369 = vand.u32 %v254, 4294901760
    %v370 = vsub.f32 %v254, %v369
    %v371 = vand.u32 %v370, 4294901760
    %v372 = vsub.f32 %v370, %v371
    %v373 = vand.u32 %v372, 4294901760
    %374 = vmatmul.mubr.f32.gmra.mrb[0].mxu0 %v373
    %v375 = vpop.f32.mrb[0].mxu0
    %v376 = vadd.f32 0.0, %v375
    %v377 = vpop.f32.mrb[0].mxu0
    %v378 = vadd.f32 0.0, %v377
    %379 = vmatprep.mubr.f32.mxu0 0.0
    %v380 = vand.u32 %v255, 4294901760
    %v381 = vsub.f32 %v255, %v380
    %v382 = vand.u32 %v381, 4294901760
    %v383 = vsub.f32 %v381, %v382
    %v384 = vand.u32 %v383, 4294901760
    %385 = vmatmul.mubr.f32.gmra.mrb[0].mxu0 %v384
    %v386 = vpop.f32.mrb[0].mxu0
    %v387 = vadd.f32 0.0, %v386
    %v388 = vpop.f32.mrb[0].mxu0
    %v389 = vadd.f32 0.0, %v388
    %390 = vmatprep.mubr.f32.mxu0 0.0
    %v391 = vand.u32 %v256, 4294901760
    %v392 = vsub.f32 %v256, %v391
    %v393 = vand.u32 %v392, 4294901760
    %v394 = vsub.f32 %v392, %v393
    %v395 = vand.u32 %v394, 4294901760
    %396 = vmatmul.mubr.f32.gmra.mrb[0].mxu0 %v395
    %v397 = vpop.f32.mrb[0].mxu0
    %v398 = vadd.f32 0.0, %v397
    %v399 = vpop.f32.mrb[0].mxu0
    %v400 = vadd.f32 0.0, %v399
    %401 = vmatprep.mubr.f32.mxu0 0.0
    %v402 = vand.u32 %v257, 4294901760
    %v403 = vsub.f32 %v257, %v402
    %v404 = vand.u32 %v403, 4294901760
    %v405 = vsub.f32 %v403, %v404
    %v406 = vand.u32 %v405, 4294901760
    %407 = vmatmul.mubr.f32.gmra.mrb[0].mxu0 %v406
    %v408 = vpop.f32.mrb[0].mxu0
    %v409 = vadd.f32 0.0, %v408
    %v410 = vpop.f32.mrb[0].mxu0
    %v411 = vadd.f32 0.0, %v410
    %412 = vmatprep.mubr.f32.mxu0 0.0
    %v413 = vand.u32 %v258, 4294901760
    %v414 = vsub.f32 %v258, %v413
    %v415 = vand.u32 %v414, 4294901760
    %v416 = vsub.f32 %v414, %v415
    %v417 = vand.u32 %v416, 4294901760
    %418 = vmatmul.mubr.f32.gmra.mrb[0].mxu0 %v417
    %v419 = vpop.f32.mrb[0].mxu0
    %v420 = vadd.f32 0.0, %v419
    %v421 = vpop.f32.mrb[0].mxu0
    %v422 = vadd.f32 0.0, %v421
    %423 = vmatprep.mubr.f32.mxu0 0.0
    %v424 = vand.u32 %v259, 4294901760
    %v425 = vsub.f32 %v259, %v424
    %v426 = vand.u32 %v425, 4294901760
    %v427 = vsub.f32 %v425, %v426
    %v428 = vand.u32 %v427, 4294901760
    %429 = vmatmul.mubr.f32.gmra.mrb[0].mxu0 %v428
    %v430 = vpop.f32.mrb[0].mxu0
    %v431 = vadd.f32 0.0, %v430
    %v432 = vpop.f32.mrb[0].mxu0
    %v433 = vadd.f32 0.0, %v432
    %434 = vmatprep.mubr.f32.mxu0 0.0
    %v435 = vand.u32 %v260, 4294901760
    %v436 = vsub.f32 %v260, %v435
    %v437 = vand.u32 %v436, 4294901760
    %v438 = vsub.f32 %v436, %v437
    %v439 = vand.u32 %v438, 4294901760
    %440 = vmatmul.mubr.f32.gmra.mrb[0].mxu0 %v439
    %v441 = vpop.f32.mrb[0].mxu0
    %v442 = vadd.f32 0.0, %v441
    %v443 = vpop.f32.mrb[0].mxu0
    %v444 = vadd.f32 0.0, %v443
    %445 = vdwg.mxu0
    %v446 = vand.u32 %v222, 4294901760
    %v447 = vsub.f32 %v222, %v446
    %v448 = vand.u32 %v447, 4294901760
    %v449 = vsub.f32 %v447, %v448
    %v450 = vand.u32 %v449, 4294901760
    %451 = vmatprep.subr.mxu0 %v450
    %v452 = vand.u32 %v221, 4294901760
    %v453 = vsub.f32 %v221, %v452
    %v454 = vand.u32 %v453, 4294901760
    %v455 = vsub.f32 %v453, %v454
    %v456 = vand.u32 %v455, 4294901760
    %457 = vmatpush1.msra.mxu0 %v456
    %v458 = vand.u32 %v224, 4294901760
    %v459 = vsub.f32 %v224, %v458
    %v460 = vand.u32 %v459, 4294901760
    %v461 = vsub.f32 %v459, %v460
    %v462 = vand.u32 %v461, 4294901760
    %463 = vmatprep.subr.mxu0 %v462
    %v464 = vand.u32 %v223, 4294901760
    %v465 = vsub.f32 %v223, %v464
    %v466 = vand.u32 %v465, 4294901760
    %v467 = vsub.f32 %v465, %v466
    %v468 = vand.u32 %v467, 4294901760
    %469 = vmatpush1.msra.mxu0 %v468
    %v470 = vand.u32 %v226, 4294901760
    %v471 = vsub.f32 %v226, %v470
    %v472 = vand.u32 %v471, 4294901760
    %v473 = vsub.f32 %v471, %v472
    %v474 = vand.u32 %v473, 4294901760
    %475 = vmatprep.subr.mxu0 %v474
    %v476 = vand.u32 %v225, 4294901760
    %v477 = vsub.f32 %v225, %v476
    %v478 = vand.u32 %v477, 4294901760
    %v479 = vsub.f32 %v477, %v478
    %v480 = vand.u32 %v479, 4294901760
    %481 = vmatpush1.msra.mxu0 %v480
    %v482 = vand.u32 %v228, 4294901760
    %v483 = vsub.f32 %v228, %v482
    %v484 = vand.u32 %v483, 4294901760
    %v485 = vsub.f32 %v483, %v484
    %v486 = vand.u32 %v485, 4294901760
    %487 = vmatprep.subr.mxu0 %v486
    %v488 = vand.u32 %v227, 4294901760
    %v489 = vsub.f32 %v227, %v488
    %v490 = vand.u32 %v489, 4294901760
    %v491 = vsub.f32 %v489, %v490
    %v492 = vand.u32 %v491, 4294901760
    %493 = vmatpush1.msra.mxu0 %v492
    %v494 = vand.u32 %v230, 4294901760
    %v495 = vsub.f32 %v230, %v494
    %v496 = vand.u32 %v495, 4294901760
    %v497 = vsub.f32 %v495, %v496
    %v498 = vand.u32 %v497, 4294901760
    %499 = vmatprep.subr.mxu0 %v498
    %v500 = vand.u32 %v229, 4294901760
    %v501 = vsub.f32 %v229, %v500
    %v502 = vand.u32 %v501, 4294901760
    %v503 = vsub.f32 %v501, %v502
    %v504 = vand.u32 %v503, 4294901760
    %505 = vmatpush1.msra.mxu0 %v504
    %v506 = vand.u32 %v232, 4294901760
    %v507 = vsub.f32 %v232, %v506
    %v508 = vand.u32 %v507, 4294901760
    %v509 = vsub.f32 %v507, %v508
    %v510 = vand.u32 %v509, 4294901760
    %511 = vmatprep.subr.mxu0 %v510
    %v512 = vand.u32 %v231, 4294901760
    %v513 = vsub.f32 %v231, %v512
    %v514 = vand.u32 %v513, 4294901760
    %v515 = vsub.f32 %v513, %v514
    %v516 = vand.u32 %v515, 4294901760
    %517 = vmatpush1.msra.mxu0 %v516
    %v518 = vand.u32 %v234, 4294901760
    %v519 = vsub.f32 %v234, %v518
    %v520 = vand.u32 %v519, 4294901760
    %v521 = vsub.f32 %v519, %v520
    %v522 = vand.u32 %v521, 4294901760
    %523 = vmatprep.subr.mxu0 %v522
    %v524 = vand.u32 %v233, 4294901760
    %v525 = vsub.f32 %v233, %v524
    %v526 = vand.u32 %v525, 4294901760
    %v527 = vsub.f32 %v525, %v526
    %v528 = vand.u32 %v527, 4294901760
    %529 = vmatpush1.msra.mxu0 %v528
    %v530 = vand.u32 %v236, 4294901760
    %v531 = vsub.f32 %v236, %v530
    %v532 = vand.u32 %v531, 4294901760
    %v533 = vsub.f32 %v531, %v532
    %v534 = vand.u32 %v533, 4294901760
    %535 = vmatprep.subr.mxu0 %v534
    %v536 = vand.u32 %v235, 4294901760
    %v537 = vsub.f32 %v235, %v536
    %v538 = vand.u32 %v537, 4294901760
    %v539 = vsub.f32 %v537, %v538
    %v540 = vand.u32 %v539, 4294901760
    %541 = vmatpush1.msra.mxu0 %v540
    %v542 = vand.u32 %v238, 4294901760
    %v543 = vsub.f32 %v238, %v542
    %v544 = vand.u32 %v543, 4294901760
    %v545 = vsub.f32 %v543, %v544
    %v546 = vand.u32 %v545, 4294901760
    %547 = vmatprep.subr.mxu0 %v546
    %v548 = vand.u32 %v237, 4294901760
    %v549 = vsub.f32 %v237, %v548
    %v550 = vand.u32 %v549, 4294901760
    %v551 = vsub.f32 %v549, %v550
    %v552 = vand.u32 %v551, 4294901760
    %553 = vmatpush1.msra.mxu0 %v552
    %v554 = vand.u32 %v240, 4294901760
    %v555 = vsub.f32 %v240, %v554
    %v556 = vand.u32 %v555, 4294901760
    %v557 = vsub.f32 %v555, %v556
    %v558 = vand.u32 %v557, 4294901760
    %559 = vmatprep.subr.mxu0 %v558
    %v560 = vand.u32 %v239, 4294901760
    %v561 = vsub.f32 %v239, %v560
    %v562 = vand.u32 %v561, 4294901760
    %v563 = vsub.f32 %v561, %v562
    %v564 = vand.u32 %v563, 4294901760
    %565 = vmatpush1.msra.mxu0 %v564
    %v566 = vand.u32 %v242, 4294901760
    %v567 = vsub.f32 %v242, %v566
    %v568 = vand.u32 %v567, 4294901760
    %v569 = vsub.f32 %v567, %v568
    %v570 = vand.u32 %v569, 4294901760
    %571 = vmatprep.subr.mxu0 %v570
    %v572 = vand.u32 %v241, 4294901760
    %v573 = vsub.f32 %v241, %v572
    %v574 = vand.u32 %v573, 4294901760
    %v575 = vsub.f32 %v573, %v574
    %v576 = vand.u32 %v575, 4294901760
    %577 = vmatpush1.msra.mxu0 %v576
    %v578 = vand.u32 %v244, 4294901760
    %v579 = vsub.f32 %v244, %v578
    %v580 = vand.u32 %v579, 4294901760
    %v581 = vsub.f32 %v579, %v580
    %v582 = vand.u32 %v581, 4294901760
    %583 = vmatprep.subr.mxu0 %v582
    %v584 = vand.u32 %v243, 4294901760
    %v585 = vsub.f32 %v243, %v584
    %v586 = vand.u32 %v585, 4294901760
    %v587 = vsub.f32 %v585, %v586
    %v588 = vand.u32 %v587, 4294901760
    %589 = vmatpush1.msra.mxu0 %v588
    %v590 = vand.u32 %v246, 4294901760
    %v591 = vsub.f32 %v246, %v590
    %v592 = vand.u32 %v591, 4294901760
    %v593 = vsub.f32 %v591, %v592
    %v594 = vand.u32 %v593, 4294901760
    %595 = vmatprep.subr.mxu0 %v594
    %v596 = vand.u32 %v245, 4294901760
    %v597 = vsub.f32 %v245, %v596
    %v598 = vand.u32 %v597, 4294901760
    %v599 = vsub.f32 %v597, %v598
    %v600 = vand.u32 %v599, 4294901760
    %601 = vmatpush1.msra.mxu0 %v600
    %v602 = vand.u32 %v248, 4294901760
    %v603 = vsub.f32 %v248, %v602
    %v604 = vand.u32 %v603, 4294901760
    %v605 = vsub.f32 %v603, %v604
    %v606 = vand.u32 %v605, 4294901760
    %607 = vmatprep.subr.mxu0 %v606
    %v608 = vand.u32 %v247, 4294901760
    %v609 = vsub.f32 %v247, %v608
    %v610 = vand.u32 %v609, 4294901760
    %v611 = vsub.f32 %v609, %v610
    %v612 = vand.u32 %v611, 4294901760
    %613 = vmatpush1.msra.mxu0 %v612
    %v614 = vand.u32 %v250, 4294901760
    %v615 = vsub.f32 %v250, %v614
    %v616 = vand.u32 %v615, 4294901760
    %v617 = vsub.f32 %v615, %v616
    %v618 = vand.u32 %v617, 4294901760
    %619 = vmatprep.subr.mxu0 %v618
    %v620 = vand.u32 %v249, 4294901760
    %v621 = vsub.f32 %v249, %v620
    %v622 = vand.u32 %v621, 4294901760
    %v623 = vsub.f32 %v621, %v622
    %v624 = vand.u32 %v623, 4294901760
    %625 = vmatpush1.msra.mxu0 %v624
    %v626 = vand.u32 %v252, 4294901760
    %v627 = vsub.f32 %v252, %v626
    %v628 = vand.u32 %v627, 4294901760
    %v629 = vsub.f32 %v627, %v628
    %v630 = vand.u32 %v629, 4294901760
    %631 = vmatprep.subr.mxu0 %v630
    %v632 = vand.u32 %v251, 4294901760
    %v633 = vsub.f32 %v251, %v632
    %v634 = vand.u32 %v633, 4294901760
    %v635 = vsub.f32 %v633, %v634
    %v636 = vand.u32 %v635, 4294901760
    %637 = vmatpush1.msra.mxu0 %v636
    %638 = vmatprep.subr.mxu0 0.0
    %639 = vmatpush1.msra.mxu0 0.0
    %640 = vmatprep.subr.mxu0 0.0
    %641 = vmatpush1.msra.mxu0 0.0
    %642 = vmatprep.subr.mxu0 0.0
    %643 = vmatpush1.msra.mxu0 0.0
    %644 = vmatprep.subr.mxu0 0.0
    %645 = vmatpush1.msra.mxu0 0.0
    %646 = vmatprep.subr.mxu0 0.0
    %647 = vmatpush1.msra.mxu0 0.0
    %648 = vmatprep.subr.mxu0 0.0
    %649 = vmatpush1.msra.mxu0 0.0
    %650 = vmatprep.subr.mxu0 0.0
    %651 = vmatpush1.msra.mxu0 0.0
    %652 = vmatprep.subr.mxu0 0.0
    %653 = vmatpush1.msra.mxu0 0.0
    %654 = vmatprep.subr.mxu0 0.0
    %655 = vmatpush1.msra.mxu0 0.0
    %656 = vmatprep.subr.mxu0 0.0
    %657 = vmatpush1.msra.mxu0 0.0
    %658 = vmatprep.subr.mxu0 0.0
    %659 = vmatpush1.msra.mxu0 0.0
    %660 = vmatprep.subr.mxu0 0.0
    %661 = vmatpush1.msra.mxu0 0.0
    %662 = vmatprep.subr.mxu0 0.0
    %663 = vmatpush1.msra.mxu0 0.0
    %664 = vmatprep.subr.mxu0 0.0
    %665 = vmatpush1.msra.mxu0 0.0
    %666 = vmatprep.subr.mxu0 0.0
    %667 = vmatpush1.msra.mxu0 0.0
    %668 = vmatprep.subr.mxu0 0.0
    %669 = vmatpush1.msra.mxu0 0.0
    %670 = vmatprep.mubr.f32.mxu0 0.0
    %v671 = vand.u32 %v253, 4294901760
    %672 = vmatmul.mubr.f32.gmra.mrb[0].mxu0 %v671
    %v673 = vpop.f32.mrb[0].mxu0
    %v674 = vadd.f32 %v365, %v673
    %v675 = vpop.f32.mrb[0].mxu0
    %v676 = vadd.f32 %v367, %v675
    %677 = vmatprep.mubr.f32.mxu0 0.0
    %v678 = vand.u32 %v254, 4294901760
    %679 = vmatmul.mubr.f32.gmra.mrb[0].mxu0 %v678
    %v680 = vpop.f32.mrb[0].mxu0
    %v681 = vadd.f32 %v376, %v680
    %v682 = vpop.f32.mrb[0].mxu0
    %v683 = vadd.f32 %v378, %v682
    %684 = vmatprep.mubr.f32.mxu0 0.0
    %v685 = vand.u32 %v255, 4294901760
    %686 = vmatmul.mubr.f32.gmra.mrb[0].mxu0 %v685
    %v687 = vpop.f32.mrb[0].mxu0
    %v688 = vadd.f32 %v387, %v687
    %v689 = vpop.f32.mrb[0].mxu0
    %v690 = vadd.f32 %v389, %v689
    %691 = vmatprep.mubr.f32.mxu0 0.0
    %v692 = vand.u32 %v256, 4294901760
    %693 = vmatmul.mubr.f32.gmra.mrb[0].mxu0 %v692
    %v694 = vpop.f32.mrb[0].mxu0
    %v695 = vadd.f32 %v398, %v694
    %v696 = vpop.f32.mrb[0].mxu0
    %v697 = vadd.f32 %v400, %v696
    %698 = vmatprep.mubr.f32.mxu0 0.0
    %v699 = vand.u32 %v257, 4294901760
    %700 = vmatmul.mubr.f32.gmra.mrb[0].mxu0 %v699
    %v701 = vpop.f32.mrb[0].mxu0
    %v702 = vadd.f32 %v409, %v701
    %v703 = vpop.f32.mrb[0].mxu0
    %v704 = vadd.f32 %v411, %v703
    %705 = vmatprep.mubr.f32.mxu0 0.0
    %v706 = vand.u32 %v258, 4294901760
    %707 = vmatmul.mubr.f32.gmra.mrb[0].mxu0 %v706
    %v708 = vpop.f32.mrb[0].mxu0
    %v709 = vadd.f32 %v420, %v708
    %v710 = vpop.f32.mrb[0].mxu0
    %v711 = vadd.f32 %v422, %v710
    %712 = vmatprep.mubr.f32.mxu0 0.0
    %v713 = vand.u32 %v259, 4294901760
    %714 = vmatmul.mubr.f32.gmra.mrb[0].mxu0 %v713
    %v715 = vpop.f32.mrb[0].mxu0
    %v716 = vadd.f32 %v431, %v715
    %v717 = vpop.f32.mrb[0].mxu0
    %v718 = vadd.f32 %v433, %v717
    %719 = vmatprep.mubr.f32.mxu0 0.0
    %v720 = vand.u32 %v260, 4294901760
    %721 = vmatmul.mubr.f32.gmra.mrb[0].mxu0 %v720
    %v722 = vpop.f32.mrb[0].mxu0
    %v723 = vadd.f32 %v442, %v722
    %v724 = vpop.f32.mrb[0].mxu0
    %v725 = vadd.f32 %v444, %v724
    %726 = vdwg.mxu0
    %v727 = vand.u32 %v222, 4294901760
    %v728 = vsub.f32 %v222, %v727
    %729 = vmatprep.subr.mxu0 %v728
    %v730 = vand.u32 %v221, 4294901760
    %v731 = vsub.f32 %v221, %v730
    %732 = vmatpush1.msra.mxu0 %v731
    %v733 = vand.u32 %v224, 4294901760
    %v734 = vsub.f32 %v224, %v733
    %735 = vmatprep.subr.mxu0 %v734
    %v736 = vand.u32 %v223, 4294901760
    %v737 = vsub.f32 %v223, %v736
    %738 = vmatpush1.msra.mxu0 %v737
    %v739 = vand.u32 %v226, 4294901760
    %v740 = vsub.f32 %v226, %v739
    %741 = vmatprep.subr.mxu0 %v740
    %v742 = vand.u32 %v225, 4294901760
    %v743 = vsub.f32 %v225, %v742
    %744 = vmatpush1.msra.mxu0 %v743
    %v745 = vand.u32 %v228, 4294901760
    %v746 = vsub.f32 %v228, %v745
    %747 = vmatprep.subr.mxu0 %v746
    %v748 = vand.u32 %v227, 4294901760
    %v749 = vsub.f32 %v227, %v748
    %750 = vmatpush1.msra.mxu0 %v749
    %v751 = vand.u32 %v230, 4294901760
    %v752 = vsub.f32 %v230, %v751
    %753 = vmatprep.subr.mxu0 %v752
    %v754 = vand.u32 %v229, 4294901760
    %v755 = vsub.f32 %v229, %v754
    %756 = vmatpush1.msra.mxu0 %v755
    %v757 = vand.u32 %v232, 4294901760
    %v758 = vsub.f32 %v232, %v757
    %759 = vmatprep.subr.mxu0 %v758
    %v760 = vand.u32 %v231, 4294901760
    %v761 = vsub.f32 %v231, %v760
    %762 = vmatpush1.msra.mxu0 %v761
    %v763 = vand.u32 %v234, 4294901760
    %v764 = vsub.f32 %v234, %v763
    %765 = vmatprep.subr.mxu0 %v764
    %v766 = vand.u32 %v233, 4294901760
    %v767 = vsub.f32 %v233, %v766
    %768 = vmatpush1.msra.mxu0 %v767
    %v769 = vand.u32 %v236, 4294901760
    %v770 = vsub.f32 %v236, %v769
    %771 = vmatprep.subr.mxu0 %v770
    %v772 = vand.u32 %v235, 4294901760
    %v773 = vsub.f32 %v235, %v772
    %774 = vmatpush1.msra.mxu0 %v773
    %v775 = vand.u32 %v238, 4294901760
    %v776 = vsub.f32 %v238, %v775
    %777 = vmatprep.subr.mxu0 %v776
    %v778 = vand.u32 %v237, 4294901760
    %v779 = vsub.f32 %v237, %v778
    %780 = vmatpush1.msra.mxu0 %v779
    %v781 = vand.u32 %v240, 4294901760
    %v782 = vsub.f32 %v240, %v781
    %783 = vmatprep.subr.mxu0 %v782
    %v784 = vand.u32 %v239, 4294901760
    %v785 = vsub.f32 %v239, %v784
    %786 = vmatpush1.msra.mxu0 %v785
    %v787 = vand.u32 %v242, 4294901760
    %v788 = vsub.f32 %v242, %v787
    %789 = vmatprep.subr.mxu0 %v788
    %v790 = vand.u32 %v241, 4294901760
    %v791 = vsub.f32 %v241, %v790
    %792 = vmatpush1.msra.mxu0 %v791
    %v793 = vand.u32 %v244, 4294901760
    %v794 = vsub.f32 %v244, %v793
    %795 = vmatprep.subr.mxu0 %v794
    %v796 = vand.u32 %v243, 4294901760
    %v797 = vsub.f32 %v243, %v796
    %798 = vmatpush1.msra.mxu0 %v797
    %v799 = vand.u32 %v246, 4294901760
    %v800 = vsub.f32 %v246, %v799
    %801 = vmatprep.subr.mxu0 %v800
    %v802 = vand.u32 %v245, 4294901760
    %v803 = vsub.f32 %v245, %v802
    %804 = vmatpush1.msra.mxu0 %v803
    %v805 = vand.u32 %v248, 4294901760
    %v806 = vsub.f32 %v248, %v805
    %807 = vmatprep.subr.mxu0 %v806
    %v808 = vand.u32 %v247, 4294901760
    %v809 = vsub.f32 %v247, %v808
    %810 = vmatpush1.msra.mxu0 %v809
    %v811 = vand.u32 %v250, 4294901760
    %v812 = vsub.f32 %v250, %v811
    %813 = vmatprep.subr.mxu0 %v812
    %v814 = vand.u32 %v249, 4294901760
    %v815 = vsub.f32 %v249, %v814
    %816 = vmatpush1.msra.mxu0 %v815
    %v817 = vand.u32 %v252, 4294901760
    %v818 = vsub.f32 %v252, %v817
    %819 = vmatprep.subr.mxu0 %v818
    %v820 = vand.u32 %v251, 4294901760
    %v821 = vsub.f32 %v251, %v820
    %822 = vmatpush1.msra.mxu0 %v821
    %823 = vmatprep.subr.mxu0 0.0
    %824 = vmatpush1.msra.mxu0 0.0
    %825 = vmatprep.subr.mxu0 0.0
    %826 = vmatpush1.msra.mxu0 0.0
    %827 = vmatprep.subr.mxu0 0.0
    %828 = vmatpush1.msra.mxu0 0.0
    %829 = vmatprep.subr.mxu0 0.0
    %830 = vmatpush1.msra.mxu0 0.0
    %831 = vmatprep.subr.mxu0 0.0
    %832 = vmatpush1.msra.mxu0 0.0
    %833 = vmatprep.subr.mxu0 0.0
    %834 = vmatpush1.msra.mxu0 0.0
    %835 = vmatprep.subr.mxu0 0.0
    %836 = vmatpush1.msra.mxu0 0.0
    %837 = vmatprep.subr.mxu0 0.0
    %838 = vmatpush1.msra.mxu0 0.0
    %839 = vmatprep.subr.mxu0 0.0
    %840 = vmatpush1.msra.mxu0 0.0
    %841 = vmatprep.subr.mxu0 0.0
    %842 = vmatpush1.msra.mxu0 0.0
    %843 = vmatprep.subr.mxu0 0.0
    %844 = vmatpush1.msra.mxu0 0.0
    %845 = vmatprep.subr.mxu0 0.0
    %846 = vmatpush1.msra.mxu0 0.0
    %847 = vmatprep.subr.mxu0 0.0
    %848 = vmatpush1.msra.mxu0 0.0
    %849 = vmatprep.subr.mxu0 0.0
    %850 = vmatpush1.msra.mxu0 0.0
    %851 = vmatprep.subr.mxu0 0.0
    %852 = vmatpush1.msra.mxu0 0.0
    %853 = vmatprep.subr.mxu0 0.0
    %854 = vmatpush1.msra.mxu0 0.0
    %855 = vmatprep.mubr.f32.mxu0 0.0
    %v856 = vand.u32 %v253, 4294901760
    %v857 = vsub.f32 %v253, %v856
    %858 = vmatmul.mubr.f32.gmra.mrb[0].mxu0 %v857
    %v859 = vpop.f32.mrb[0].mxu0
    %v860 = vadd.f32 %v674, %v859
    %v861 = vpop.f32.mrb[0].mxu0
    %v862 = vadd.f32 %v676, %v861
    %863 = vmatprep.mubr.f32.mxu0 0.0
    %v864 = vand.u32 %v254, 4294901760
    %v865 = vsub.f32 %v254, %v864
    %866 = vmatmul.mubr.f32.gmra.mrb[0].mxu0 %v865
    %v867 = vpop.f32.mrb[0].mxu0
    %v868 = vadd.f32 %v681, %v867
    %v869 = vpop.f32.mrb[0].mxu0
    %v870 = vadd.f32 %v683, %v869
    %871 = vmatprep.mubr.f32.mxu0 0.0
    %v872 = vand.u32 %v255, 4294901760
    %v873 = vsub.f32 %v255, %v872
    %874 = vmatmul.mubr.f32.gmra.mrb[0].mxu0 %v873
    %v875 = vpop.f32.mrb[0].mxu0
    %v876 = vadd.f32 %v688, %v875
    %v877 = vpop.f32.mrb[0].mxu0
    %v878 = vadd.f32 %v690, %v877
    %879 = vmatprep.mubr.f32.mxu0 0.0
    %v880 = vand.u32 %v256, 4294901760
    %v881 = vsub.f32 %v256, %v880
    %882 = vmatmul.mubr.f32.gmra.mrb[0].mxu0 %v881
    %v883 = vpop.f32.mrb[0].mxu0
    %v884 = vadd.f32 %v695, %v883
    %v885 = vpop.f32.mrb[0].mxu0
    %v886 = vadd.f32 %v697, %v885
    %887 = vmatprep.mubr.f32.mxu0 0.0
    %v888 = vand.u32 %v257, 4294901760
    %v889 = vsub.f32 %v257, %v888
    %890 = vmatmul.mubr.f32.gmra.mrb[0].mxu0 %v889
    %v891 = vpop.f32.mrb[0].mxu0
    %v892 = vadd.f32 %v702, %v891
    %v893 = vpop.f32.mrb[0].mxu0
    %v894 = vadd.f32 %v704, %v893
    %895 = vmatprep.mubr.f32.mxu0 0.0
    %v896 = vand.u32 %v258, 4294901760
    %v897 = vsub.f32 %v258, %v896
    %898 = vmatmul.mubr.f32.gmra.mrb[0].mxu0 %v897
    %v899 = vpop.f32.mrb[0].mxu0
    %v900 = vadd.f32 %v709, %v899
    %v901 = vpop.f32.mrb[0].mxu0
    %v902 = vadd.f32 %v711, %v901
    %903 = vmatprep.mubr.f32.mxu0 0.0
    %v904 = vand.u32 %v259, 4294901760
    %v905 = vsub.f32 %v259, %v904
    %906 = vmatmul.mubr.f32.gmra.mrb[0].mxu0 %v905
    %v907 = vpop.f32.mrb[0].mxu0
    %v908 = vadd.f32 %v716, %v907
    %v909 = vpop.f32.mrb[0].mxu0
    %v910 = vadd.f32 %v718, %v909
    %911 = vmatprep.mubr.f32.mxu0 0.0
    %v912 = vand.u32 %v260, 4294901760
    %v913 = vsub.f32 %v260, %v912
    %914 = vmatmul.mubr.f32.gmra.mrb[0].mxu0 %v913
    %v915 = vpop.f32.mrb[0].mxu0
    %v916 = vadd.f32 %v723, %v915
    %v917 = vpop.f32.mrb[0].mxu0
    %v918 = vadd.f32 %v725, %v917
    %919 = vdwg.mxu0
    %v920 = vand.u32 %v222, 4294901760
    %921 = vmatprep.subr.mxu0 %v920
    %v922 = vand.u32 %v221, 4294901760
    %923 = vmatpush1.msra.mxu0 %v922
    %v924 = vand.u32 %v224, 4294901760
    %925 = vmatprep.subr.mxu0 %v924
    %v926 = vand.u32 %v223, 4294901760
    %927 = vmatpush1.msra.mxu0 %v926
    %v928 = vand.u32 %v226, 4294901760
    %929 = vmatprep.subr.mxu0 %v928
    %v930 = vand.u32 %v225, 4294901760
    %931 = vmatpush1.msra.mxu0 %v930
    %v932 = vand.u32 %v228, 4294901760
    %933 = vmatprep.subr.mxu0 %v932
    %v934 = vand.u32 %v227, 4294901760
    %935 = vmatpush1.msra.mxu0 %v934
    %v936 = vand.u32 %v230, 4294901760
    %937 = vmatprep.subr.mxu0 %v936
    %v938 = vand.u32 %v229, 4294901760
    %939 = vmatpush1.msra.mxu0 %v938
    %v940 = vand.u32 %v232, 4294901760
    %941 = vmatprep.subr.mxu0 %v940
    %v942 = vand.u32 %v231, 4294901760
    %943 = vmatpush1.msra.mxu0 %v942
    %v944 = vand.u32 %v234, 4294901760
    %945 = vmatprep.subr.mxu0 %v944
    %v946 = vand.u32 %v233, 4294901760
    %947 = vmatpush1.msra.mxu0 %v946
    %v948 = vand.u32 %v236, 4294901760
    %949 = vmatprep.subr.mxu0 %v948
    %v950 = vand.u32 %v235, 4294901760
    %951 = vmatpush1.msra.mxu0 %v950
    %v952 = vand.u32 %v238, 4294901760
    %953 = vmatprep.subr.mxu0 %v952
    %v954 = vand.u32 %v237, 4294901760
    %955 = vmatpush1.msra.mxu0 %v954
    %v956 = vand.u32 %v240, 4294901760
    %957 = vmatprep.subr.mxu0 %v956
    %v958 = vand.u32 %v239, 4294901760
    %959 = vmatpush1.msra.mxu0 %v958
    %v960 = vand.u32 %v242, 4294901760
    %961 = vmatprep.subr.mxu0 %v960
    %v962 = vand.u32 %v241, 4294901760
    %963 = vmatpush1.msra.mxu0 %v962
    %v964 = vand.u32 %v244, 4294901760
    %965 = vmatprep.subr.mxu0 %v964
    %v966 = vand.u32 %v243, 4294901760
    %967 = vmatpush1.msra.mxu0 %v966
    %v968 = vand.u32 %v246, 4294901760
    %969 = vmatprep.subr.mxu0 %v968
    %v970 = vand.u32 %v245, 4294901760
    %971 = vmatpush1.msra.mxu0 %v970
    %v972 = vand.u32 %v248, 4294901760
    %973 = vmatprep.subr.mxu0 %v972
    %v974 = vand.u32 %v247, 4294901760
    %975 = vmatpush1.msra.mxu0 %v974
    %v976 = vand.u32 %v250, 4294901760
    %977 = vmatprep.subr.mxu0 %v976
    %v978 = vand.u32 %v249, 4294901760
    %979 = vmatpush1.msra.mxu0 %v978
    %v980 = vand.u32 %v252, 4294901760
    %981 = vmatprep.subr.mxu0 %v980
    %v982 = vand.u32 %v251, 4294901760
    %983 = vmatpush1.msra.mxu0 %v982
    %984 = vmatprep.subr.mxu0 0.0
    %985 = vmatpush1.msra.mxu0 0.0
    %986 = vmatprep.subr.mxu0 0.0
    %987 = vmatpush1.msra.mxu0 0.0
    %988 = vmatprep.subr.mxu0 0.0
    %989 = vmatpush1.msra.mxu0 0.0
    %990 = vmatprep.subr.mxu0 0.0
    %991 = vmatpush1.msra.mxu0 0.0
    %992 = vmatprep.subr.mxu0 0.0
    %993 = vmatpush1.msra.mxu0 0.0
    %994 = vmatprep.subr.mxu0 0.0
    %995 = vmatpush1.msra.mxu0 0.0
    %996 = vmatprep.subr.mxu0 0.0
    %997 = vmatpush1.msra.mxu0 0.0
    %998 = vmatprep.subr.mxu0 0.0
    %999 = vmatpush1.msra.mxu0 0.0
    %1000 = vmatprep.subr.mxu0 0.0
    %1001 = vmatpush1.msra.mxu0 0.0
    %1002 = vmatprep.subr.mxu0 0.0
    %1003 = vmatpush1.msra.mxu0 0.0
    %1004 = vmatprep.subr.mxu0 0.0
    %1005 = vmatpush1.msra.mxu0 0.0
    %1006 = vmatprep.subr.mxu0 0.0
    %1007 = vmatpush1.msra.mxu0 0.0
    %1008 = vmatprep.subr.mxu0 0.0
    %1009 = vmatpush1.msra.mxu0 0.0
    %1010 = vmatprep.subr.mxu0 0.0
    %1011 = vmatpush1.msra.mxu0 0.0
    %1012 = vmatprep.subr.mxu0 0.0
    %1013 = vmatpush1.msra.mxu0 0.0
    %1014 = vmatprep.subr.mxu0 0.0
    %1015 = vmatpush1.msra.mxu0 0.0
    %1016 = vmatprep.mubr.f32.mxu0 0.0
    %v1017 = vand.u32 %v253, 4294901760
    %v1018 = vsub.f32 %v253, %v1017
    %v1019 = vand.u32 %v1018, 4294901760
    %1020 = vmatmul.mubr.f32.gmra.mrb[0].mxu0 %v1019
    %v1021 = vpop.f32.mrb[0].mxu0
    %v1022 = vadd.f32 %v860, %v1021
    %v1023 = vpop.f32.mrb[0].mxu0
    %v1024 = vadd.f32 %v862, %v1023
    %1025 = vmatprep.mubr.f32.mxu0 0.0
    %v1026 = vand.u32 %v254, 4294901760
    %v1027 = vsub.f32 %v254, %v1026
    %v1028 = vand.u32 %v1027, 4294901760
    %1029 = vmatmul.mubr.f32.gmra.mrb[0].mxu0 %v1028
    %v1030 = vpop.f32.mrb[0].mxu0
    %v1031 = vadd.f32 %v868, %v1030
    %v1032 = vpop.f32.mrb[0].mxu0
    %v1033 = vadd.f32 %v870, %v1032
    %1034 = vmatprep.mubr.f32.mxu0 0.0
    %v1035 = vand.u32 %v255, 4294901760
    %v1036 = vsub.f32 %v255, %v1035
    %v1037 = vand.u32 %v1036, 4294901760
    %1038 = vmatmul.mubr.f32.gmra.mrb[0].mxu0 %v1037
    %v1039 = vpop.f32.mrb[0].mxu0
    %v1040 = vadd.f32 %v876, %v1039
    %v1041 = vpop.f32.mrb[0].mxu0
    %v1042 = vadd.f32 %v878, %v1041
    %1043 = vmatprep.mubr.f32.mxu0 0.0
    %v1044 = vand.u32 %v256, 4294901760
    %v1045 = vsub.f32 %v256, %v1044
    %v1046 = vand.u32 %v1045, 4294901760
    %1047 = vmatmul.mubr.f32.gmra.mrb[0].mxu0 %v1046
    %v1048 = vpop.f32.mrb[0].mxu0
    %v1049 = vadd.f32 %v884, %v1048
    %v1050 = vpop.f32.mrb[0].mxu0
    %v1051 = vadd.f32 %v886, %v1050
    %1052 = vmatprep.mubr.f32.mxu0 0.0
    %v1053 = vand.u32 %v257, 4294901760
    %v1054 = vsub.f32 %v257, %v1053
    %v1055 = vand.u32 %v1054, 4294901760
    %1056 = vmatmul.mubr.f32.gmra.mrb[0].mxu0 %v1055
    %v1057 = vpop.f32.mrb[0].mxu0
    %v1058 = vadd.f32 %v892, %v1057
    %v1059 = vpop.f32.mrb[0].mxu0
    %v1060 = vadd.f32 %v894, %v1059
    %1061 = vmatprep.mubr.f32.mxu0 0.0
    %v1062 = vand.u32 %v258, 4294901760
    %v1063 = vsub.f32 %v258, %v1062
    %v1064 = vand.u32 %v1063, 4294901760
    %1065 = vmatmul.mubr.f32.gmra.mrb[0].mxu0 %v1064
    %v1066 = vpop.f32.mrb[0].mxu0
    %v1067 = vadd.f32 %v900, %v1066
    %v1068 = vpop.f32.mrb[0].mxu0
    %v1069 = vadd.f32 %v902, %v1068
    %1070 = vmatprep.mubr.f32.mxu0 0.0
    %v1071 = vand.u32 %v259, 4294901760
    %v1072 = vsub.f32 %v259, %v1071
    %v1073 = vand.u32 %v1072, 4294901760
    %1074 = vmatmul.mubr.f32.gmra.mrb[0].mxu0 %v1073
    %v1075 = vpop.f32.mrb[0].mxu0
    %v1076 = vadd.f32 %v908, %v1075
    %v1077 = vpop.f32.mrb[0].mxu0
    %v1078 = vadd.f32 %v910, %v1077
    %1079 = vmatprep.mubr.f32.mxu0 0.0
    %v1080 = vand.u32 %v260, 4294901760
    %v1081 = vsub.f32 %v260, %v1080
    %v1082 = vand.u32 %v1081, 4294901760
    %1083 = vmatmul.mubr.f32.gmra.mrb[0].mxu0 %v1082
    %v1084 = vpop.f32.mrb[0].mxu0
    %v1085 = vadd.f32 %v916, %v1084
    %v1086 = vpop.f32.mrb[0].mxu0
    %v1087 = vadd.f32 %v918, %v1086
    %1088 = vdwg.mxu0
    %v1089 = vand.u32 %v222, 4294901760
    %v1090 = vsub.f32 %v222, %v1089
    %v1091 = vand.u32 %v1090, 4294901760
    %1092 = vmatprep.subr.mxu0 %v1091
    %v1093 = vand.u32 %v221, 4294901760
    %v1094 = vsub.f32 %v221, %v1093
    %v1095 = vand.u32 %v1094, 4294901760
    %1096 = vmatpush1.msra.mxu0 %v1095
    %v1097 = vand.u32 %v224, 4294901760
    %v1098 = vsub.f32 %v224, %v1097
    %v1099 = vand.u32 %v1098, 4294901760
    %1100 = vmatprep.subr.mxu0 %v1099
    %v1101 = vand.u32 %v223, 4294901760
    %v1102 = vsub.f32 %v223, %v1101
    %v1103 = vand.u32 %v1102, 4294901760
    %1104 = vmatpush1.msra.mxu0 %v1103
    %v1105 = vand.u32 %v226, 4294901760
    %v1106 = vsub.f32 %v226, %v1105
    %v1107 = vand.u32 %v1106, 4294901760
    %1108 = vmatprep.subr.mxu0 %v1107
    %v1109 = vand.u32 %v225, 4294901760
    %v1110 = vsub.f32 %v225, %v1109
    %v1111 = vand.u32 %v1110, 4294901760
    %1112 = vmatpush1.msra.mxu0 %v1111
    %v1113 = vand.u32 %v228, 4294901760
    %v1114 = vsub.f32 %v228, %v1113
    %v1115 = vand.u32 %v1114, 4294901760
    %1116 = vmatprep.subr.mxu0 %v1115
    %v1117 = vand.u32 %v227, 4294901760
    %v1118 = vsub.f32 %v227, %v1117
    %v1119 = vand.u32 %v1118, 4294901760
    %1120 = vmatpush1.msra.mxu0 %v1119
    %v1121 = vand.u32 %v230, 4294901760
    %v1122 = vsub.f32 %v230, %v1121
    %v1123 = vand.u32 %v1122, 4294901760
    %1124 = vmatprep.subr.mxu0 %v1123
    %v1125 = vand.u32 %v229, 4294901760
    %v1126 = vsub.f32 %v229, %v1125
    %v1127 = vand.u32 %v1126, 4294901760
    %1128 = vmatpush1.msra.mxu0 %v1127
    %v1129 = vand.u32 %v232, 4294901760
    %v1130 = vsub.f32 %v232, %v1129
    %v1131 = vand.u32 %v1130, 4294901760
    %1132 = vmatprep.subr.mxu0 %v1131
    %v1133 = vand.u32 %v231, 4294901760
    %v1134 = vsub.f32 %v231, %v1133
    %v1135 = vand.u32 %v1134, 4294901760
    %1136 = vmatpush1.msra.mxu0 %v1135
    %v1137 = vand.u32 %v234, 4294901760
    %v1138 = vsub.f32 %v234, %v1137
    %v1139 = vand.u32 %v1138, 4294901760
    %1140 = vmatprep.subr.mxu0 %v1139
    %v1141 = vand.u32 %v233, 4294901760
    %v1142 = vsub.f32 %v233, %v1141
    %v1143 = vand.u32 %v1142, 4294901760
    %1144 = vmatpush1.msra.mxu0 %v1143
    %v1145 = vand.u32 %v236, 4294901760
    %v1146 = vsub.f32 %v236, %v1145
    %v1147 = vand.u32 %v1146, 4294901760
    %1148 = vmatprep.subr.mxu0 %v1147
    %v1149 = vand.u32 %v235, 4294901760
    %v1150 = vsub.f32 %v235, %v1149
    %v1151 = vand.u32 %v1150, 4294901760
    %1152 = vmatpush1.msra.mxu0 %v1151
    %v1153 = vand.u32 %v238, 4294901760
    %v1154 = vsub.f32 %v238, %v1153
    %v1155 = vand.u32 %v1154, 4294901760
    %1156 = vmatprep.subr.mxu0 %v1155
    %v1157 = vand.u32 %v237, 4294901760
    %v1158 = vsub.f32 %v237, %v1157
    %v1159 = vand.u32 %v1158, 4294901760
    %1160 = vmatpush1.msra.mxu0 %v1159
    %v1161 = vand.u32 %v240, 4294901760
    %v1162 = vsub.f32 %v240, %v1161
    %v1163 = vand.u32 %v1162, 4294901760
    %1164 = vmatprep.subr.mxu0 %v1163
    %v1165 = vand.u32 %v239, 4294901760
    %v1166 = vsub.f32 %v239, %v1165
    %v1167 = vand.u32 %v1166, 4294901760
    %1168 = vmatpush1.msra.mxu0 %v1167
    %v1169 = vand.u32 %v242, 4294901760
    %v1170 = vsub.f32 %v242, %v1169
    %v1171 = vand.u32 %v1170, 4294901760
    %1172 = vmatprep.subr.mxu0 %v1171
    %v1173 = vand.u32 %v241, 4294901760
    %v1174 = vsub.f32 %v241, %v1173
    %v1175 = vand.u32 %v1174, 4294901760
    %1176 = vmatpush1.msra.mxu0 %v1175
    %v1177 = vand.u32 %v244, 4294901760
    %v1178 = vsub.f32 %v244, %v1177
    %v1179 = vand.u32 %v1178, 4294901760
    %1180 = vmatprep.subr.mxu0 %v1179
    %v1181 = vand.u32 %v243, 4294901760
    %v1182 = vsub.f32 %v243, %v1181
    %v1183 = vand.u32 %v1182, 4294901760
    %1184 = vmatpush1.msra.mxu0 %v1183
    %v1185 = vand.u32 %v246, 4294901760
    %v1186 = vsub.f32 %v246, %v1185
    %v1187 = vand.u32 %v1186, 4294901760
    %1188 = vmatprep.subr.mxu0 %v1187
    %v1189 = vand.u32 %v245, 4294901760
    %v1190 = vsub.f32 %v245, %v1189
    %v1191 = vand.u32 %v1190, 4294901760
    %1192 = vmatpush1.msra.mxu0 %v1191
    %v1193 = vand.u32 %v248, 4294901760
    %v1194 = vsub.f32 %v248, %v1193
    %v1195 = vand.u32 %v1194, 4294901760
    %1196 = vmatprep.subr.mxu0 %v1195
    %v1197 = vand.u32 %v247, 4294901760
    %v1198 = vsub.f32 %v247, %v1197
    %v1199 = vand.u32 %v1198, 4294901760
    %1200 = vmatpush1.msra.mxu0 %v1199
    %v1201 = vand.u32 %v250, 4294901760
    %v1202 = vsub.f32 %v250, %v1201
    %v1203 = vand.u32 %v1202, 4294901760
    %1204 = vmatprep.subr.mxu0 %v1203
    %v1205 = vand.u32 %v249, 4294901760
    %v1206 = vsub.f32 %v249, %v1205
    %v1207 = vand.u32 %v1206, 4294901760
    %1208 = vmatpush1.msra.mxu0 %v1207
    %v1209 = vand.u32 %v252, 4294901760
    %v1210 = vsub.f32 %v252, %v1209
    %v1211 = vand.u32 %v1210, 4294901760
    %1212 = vmatprep.subr.mxu0 %v1211
    %v1213 = vand.u32 %v251, 4294901760
    %v1214 = vsub.f32 %v251, %v1213
    %v1215 = vand.u32 %v1214, 4294901760
    %1216 = vmatpush1.msra.mxu0 %v1215
    %1217 = vmatprep.subr.mxu0 0.0
    %1218 = vmatpush1.msra.mxu0 0.0
    %1219 = vmatprep.subr.mxu0 0.0
    %1220 = vmatpush1.msra.mxu0 0.0
    %1221 = vmatprep.subr.mxu0 0.0
    %1222 = vmatpush1.msra.mxu0 0.0
    %1223 = vmatprep.subr.mxu0 0.0
    %1224 = vmatpush1.msra.mxu0 0.0
    %1225 = vmatprep.subr.mxu0 0.0
    %1226 = vmatpush1.msra.mxu0 0.0
    %1227 = vmatprep.subr.mxu0 0.0
    %1228 = vmatpush1.msra.mxu0 0.0
    %1229 = vmatprep.subr.mxu0 0.0
    %1230 = vmatpush1.msra.mxu0 0.0
    %1231 = vmatprep.subr.mxu0 0.0
    %1232 = vmatpush1.msra.mxu0 0.0
    %1233 = vmatprep.subr.mxu0 0.0
    %1234 = vmatpush1.msra.mxu0 0.0
    %1235 = vmatprep.subr.mxu0 0.0
    %1236 = vmatpush1.msra.mxu0 0.0
    %1237 = vmatprep.subr.mxu0 0.0
    %1238 = vmatpush1.msra.mxu0 0.0
    %1239 = vmatprep.subr.mxu0 0.0
    %1240 = vmatpush1.msra.mxu0 0.0
    %1241 = vmatprep.subr.mxu0 0.0
    %1242 = vmatpush1.msra.mxu0 0.0
    %1243 = vmatprep.subr.mxu0 0.0
    %1244 = vmatpush1.msra.mxu0 0.0
    %1245 = vmatprep.subr.mxu0 0.0
    %1246 = vmatpush1.msra.mxu0 0.0
    %1247 = vmatprep.subr.mxu0 0.0
    %1248 = vmatpush1.msra.mxu0 0.0
    %1249 = vmatprep.mubr.f32.mxu0 0.0
    %v1250 = vand.u32 %v253, 4294901760
    %1251 = vmatmul.mubr.f32.gmra.mrb[0].mxu0 %v1250
    %v1252 = vpop.f32.mrb[0].mxu0
    %v1253 = vadd.f32 %v1022, %v1252
    %v1254 = vpop.f32.mrb[0].mxu0
    %v1255 = vadd.f32 %v1024, %v1254
    %1256 = vmatprep.mubr.f32.mxu0 0.0
    %v1257 = vand.u32 %v254, 4294901760
    %1258 = vmatmul.mubr.f32.gmra.mrb[0].mxu0 %v1257
    %v1259 = vpop.f32.mrb[0].mxu0
    %v1260 = vadd.f32 %v1031, %v1259
    %v1261 = vpop.f32.mrb[0].mxu0
    %v1262 = vadd.f32 %v1033, %v1261
    %1263 = vmatprep.mubr.f32.mxu0 0.0
    %v1264 = vand.u32 %v255, 4294901760
    %1265 = vmatmul.mubr.f32.gmra.mrb[0].mxu0 %v1264
    %v1266 = vpop.f32.mrb[0].mxu0
    %v1267 = vadd.f32 %v1040, %v1266
    %v1268 = vpop.f32.mrb[0].mxu0
    %v1269 = vadd.f32 %v1042, %v1268
    %1270 = vmatprep.mubr.f32.mxu0 0.0
    %v1271 = vand.u32 %v256, 4294901760
    %1272 = vmatmul.mubr.f32.gmra.mrb[0].mxu0 %v1271
    %v1273 = vpop.f32.mrb[0].mxu0
    %v1274 = vadd.f32 %v1049, %v1273
    %v1275 = vpop.f32.mrb[0].mxu0
    %v1276 = vadd.f32 %v1051, %v1275
    %1277 = vmatprep.mubr.f32.mxu0 0.0
    %v1278 = vand.u32 %v257, 4294901760
    %1279 = vmatmul.mubr.f32.gmra.mrb[0].mxu0 %v1278
    %v1280 = vpop.f32.mrb[0].mxu0
    %v1281 = vadd.f32 %v1058, %v1280
    %v1282 = vpop.f32.mrb[0].mxu0
    %v1283 = vadd.f32 %v1060, %v1282
    %1284 = vmatprep.mubr.f32.mxu0 0.0
    %v1285 = vand.u32 %v258, 4294901760
    %1286 = vmatmul.mubr.f32.gmra.mrb[0].mxu0 %v1285
    %v1287 = vpop.f32.mrb[0].mxu0
    %v1288 = vadd.f32 %v1067, %v1287
    %v1289 = vpop.f32.mrb[0].mxu0
    %v1290 = vadd.f32 %v1069, %v1289
    %1291 = vmatprep.mubr.f32.mxu0 0.0
    %v1292 = vand.u32 %v259, 4294901760
    %1293 = vmatmul.mubr.f32.gmra.mrb[0].mxu0 %v1292
    %v1294 = vpop.f32.mrb[0].mxu0
    %v1295 = vadd.f32 %v1076, %v1294
    %v1296 = vpop.f32.mrb[0].mxu0
    %v1297 = vadd.f32 %v1078, %v1296
    %1298 = vmatprep.mubr.f32.mxu0 0.0
    %v1299 = vand.u32 %v260, 4294901760
    %1300 = vmatmul.mubr.f32.gmra.mrb[0].mxu0 %v1299
    %v1301 = vpop.f32.mrb[0].mxu0
    %v1302 = vadd.f32 %v1085, %v1301
    %v1303 = vpop.f32.mrb[0].mxu0
    %v1304 = vadd.f32 %v1087, %v1303
    %1305 = vdwg.mxu0
    %v1306 = vand.u32 %v222, 4294901760
    %1307 = vmatprep.subr.mxu0 %v1306
    %v1308 = vand.u32 %v221, 4294901760
    %1309 = vmatpush1.msra.mxu0 %v1308
    %v1310 = vand.u32 %v224, 4294901760
    %1311 = vmatprep.subr.mxu0 %v1310
    %v1312 = vand.u32 %v223, 4294901760
    %1313 = vmatpush1.msra.mxu0 %v1312
    %v1314 = vand.u32 %v226, 4294901760
    %1315 = vmatprep.subr.mxu0 %v1314
    %v1316 = vand.u32 %v225, 4294901760
    %1317 = vmatpush1.msra.mxu0 %v1316
    %v1318 = vand.u32 %v228, 4294901760
    %1319 = vmatprep.subr.mxu0 %v1318
    %v1320 = vand.u32 %v227, 4294901760
    %1321 = vmatpush1.msra.mxu0 %v1320
    %v1322 = vand.u32 %v230, 4294901760
    %1323 = vmatprep.subr.mxu0 %v1322
    %v1324 = vand.u32 %v229, 4294901760
    %1325 = vmatpush1.msra.mxu0 %v1324
    %v1326 = vand.u32 %v232, 4294901760
    %1327 = vmatprep.subr.mxu0 %v1326
    %v1328 = vand.u32 %v231, 4294901760
    %1329 = vmatpush1.msra.mxu0 %v1328
    %v1330 = vand.u32 %v234, 4294901760
    %1331 = vmatprep.subr.mxu0 %v1330
    %v1332 = vand.u32 %v233, 4294901760
    %1333 = vmatpush1.msra.mxu0 %v1332
    %v1334 = vand.u32 %v236, 4294901760
    %1335 = vmatprep.subr.mxu0 %v1334
    %v1336 = vand.u32 %v235, 4294901760
    %1337 = vmatpush1.msra.mxu0 %v1336
    %v1338 = vand.u32 %v238, 4294901760
    %1339 = vmatprep.subr.mxu0 %v1338
    %v1340 = vand.u32 %v237, 4294901760
    %1341 = vmatpush1.msra.mxu0 %v1340
    %v1342 = vand.u32 %v240, 4294901760
    %1343 = vmatprep.subr.mxu0 %v1342
    %v1344 = vand.u32 %v239, 4294901760
    %1345 = vmatpush1.msra.mxu0 %v1344
    %v1346 = vand.u32 %v242, 4294901760
    %1347 = vmatprep.subr.mxu0 %v1346
    %v1348 = vand.u32 %v241, 4294901760
    %1349 = vmatpush1.msra.mxu0 %v1348
    %v1350 = vand.u32 %v244, 4294901760
    %1351 = vmatprep.subr.mxu0 %v1350
    %v1352 = vand.u32 %v243, 4294901760
    %1353 = vmatpush1.msra.mxu0 %v1352
    %v1354 = vand.u32 %v246, 4294901760
    %1355 = vmatprep.subr.mxu0 %v1354
    %v1356 = vand.u32 %v245, 4294901760
    %1357 = vmatpush1.msra.mxu0 %v1356
    %v1358 = vand.u32 %v248, 4294901760
    %1359 = vmatprep.subr.mxu0 %v1358
    %v1360 = vand.u32 %v247, 4294901760
    %1361 = vmatpush1.msra.mxu0 %v1360
    %v1362 = vand.u32 %v250, 4294901760
    %1363 = vmatprep.subr.mxu0 %v1362
    %v1364 = vand.u32 %v249, 4294901760
    %1365 = vmatpush1.msra.mxu0 %v1364
    %v1366 = vand.u32 %v252, 4294901760
    %1367 = vmatprep.subr.mxu0 %v1366
    %v1368 = vand.u32 %v251, 4294901760
    %1369 = vmatpush1.msra.mxu0 %v1368
    %1370 = vmatprep.subr.mxu0 0.0
    %1371 = vmatpush1.msra.mxu0 0.0
    %1372 = vmatprep.subr.mxu0 0.0
    %1373 = vmatpush1.msra.mxu0 0.0
    %1374 = vmatprep.subr.mxu0 0.0
    %1375 = vmatpush1.msra.mxu0 0.0
    %1376 = vmatprep.subr.mxu0 0.0
    %1377 = vmatpush1.msra.mxu0 0.0
    %1378 = vmatprep.subr.mxu0 0.0
    %1379 = vmatpush1.msra.mxu0 0.0
    %1380 = vmatprep.subr.mxu0 0.0
    %1381 = vmatpush1.msra.mxu0 0.0
    %1382 = vmatprep.subr.mxu0 0.0
    %1383 = vmatpush1.msra.mxu0 0.0
    %1384 = vmatprep.subr.mxu0 0.0
    %1385 = vmatpush1.msra.mxu0 0.0
    %1386 = vmatprep.subr.mxu0 0.0
    %1387 = vmatpush1.msra.mxu0 0.0
    %1388 = vmatprep.subr.mxu0 0.0
    %1389 = vmatpush1.msra.mxu0 0.0
    %1390 = vmatprep.subr.mxu0 0.0
    %1391 = vmatpush1.msra.mxu0 0.0
    %1392 = vmatprep.subr.mxu0 0.0
    %1393 = vmatpush1.msra.mxu0 0.0
    %1394 = vmatprep.subr.mxu0 0.0
    %1395 = vmatpush1.msra.mxu0 0.0
    %1396 = vmatprep.subr.mxu0 0.0
    %1397 = vmatpush1.msra.mxu0 0.0
    %1398 = vmatprep.subr.mxu0 0.0
    %1399 = vmatpush1.msra.mxu0 0.0
    %1400 = vmatprep.subr.mxu0 0.0
    %1401 = vmatpush1.msra.mxu0 0.0
    %1402 = vmatprep.mubr.f32.mxu0 0.0
    %v1403 = vand.u32 %v253, 4294901760
    %1404 = vmatmul.mubr.f32.gmra.mrb[0].mxu0 %v1403
    %v1405 = vpop.f32.mrb[0].mxu0
    %v1406 = vadd.f32 %v1253, %v1405
    %v1407 = vpop.f32.mrb[0].mxu0
    %v1408 = vadd.f32 %v1255, %v1407
    %1409 = vmatprep.mubr.f32.mxu0 0.0
    %v1410 = vand.u32 %v254, 4294901760
    %1411 = vmatmul.mubr.f32.gmra.mrb[0].mxu0 %v1410
    %v1412 = vpop.f32.mrb[0].mxu0
    %v1413 = vadd.f32 %v1260, %v1412
    %v1414 = vpop.f32.mrb[0].mxu0
    %v1415 = vadd.f32 %v1262, %v1414
    %1416 = vmatprep.mubr.f32.mxu0 0.0
    %v1417 = vand.u32 %v255, 4294901760
    %1418 = vmatmul.mubr.f32.gmra.mrb[0].mxu0 %v1417
    %v1419 = vpop.f32.mrb[0].mxu0
    %v1420 = vadd.f32 %v1267, %v1419
    %v1421 = vpop.f32.mrb[0].mxu0
    %v1422 = vadd.f32 %v1269, %v1421
    %1423 = vmatprep.mubr.f32.mxu0 0.0
    %v1424 = vand.u32 %v256, 4294901760
    %1425 = vmatmul.mubr.f32.gmra.mrb[0].mxu0 %v1424
    %v1426 = vpop.f32.mrb[0].mxu0
    %v1427 = vadd.f32 %v1274, %v1426
    %v1428 = vpop.f32.mrb[0].mxu0
    %v1429 = vadd.f32 %v1276, %v1428
    %1430 = vmatprep.mubr.f32.mxu0 0.0
    %v1431 = vand.u32 %v257, 4294901760
    %1432 = vmatmul.mubr.f32.gmra.mrb[0].mxu0 %v1431
    %v1433 = vpop.f32.mrb[0].mxu0
    %v1434 = vadd.f32 %v1281, %v1433
    %v1435 = vpop.f32.mrb[0].mxu0
    %v1436 = vadd.f32 %v1283, %v1435
    %1437 = vmatprep.mubr.f32.mxu0 0.0
    %v1438 = vand.u32 %v258, 4294901760
    %1439 = vmatmul.mubr.f32.gmra.mrb[0].mxu0 %v1438
    %v1440 = vpop.f32.mrb[0].mxu0
    %v1441 = vadd.f32 %v1288, %v1440
    %v1442 = vpop.f32.mrb[0].mxu0
    %v1443 = vadd.f32 %v1290, %v1442
    %1444 = vmatprep.mubr.f32.mxu0 0.0
    %v1445 = vand.u32 %v259, 4294901760
    %1446 = vmatmul.mubr.f32.gmra.mrb[0].mxu0 %v1445
    %v1447 = vpop.f32.mrb[0].mxu0
    %v1448 = vadd.f32 %v1295, %v1447
    %v1449 = vpop.f32.mrb[0].mxu0
    %v1450 = vadd.f32 %v1297, %v1449
    %1451 = vmatprep.mubr.f32.mxu0 0.0
    %v1452 = vand.u32 %v260, 4294901760
    %1453 = vmatmul.mubr.f32.gmra.mrb[0].mxu0 %v1452
    %v1454 = vpop.f32.mrb[0].mxu0
    %v1455 = vadd.f32 %v1302, %v1454
    %v1456 = vpop.f32.mrb[0].mxu0
    %v1457 = vadd.f32 %v1304, %v1456
    %1458 = vdwg.mxu0
    %v1459 = vmul.f32 %v1406, %v1434
    %v1460 = vmul.f32 %v1408, %v1436
    %v1461 = vmul.f32 %v1413, %v1441
    %v1462 = vmul.f32 %v1415, %v1443
    %v1463 = vmul.f32 %v1420, %v1448
    %v1464 = vmul.f32 %v1422, %v1450
    %v1465 = vmul.f32 %v1427, %v1455
    %v1466 = vmul.f32 %v1429, %v1457
    %v1467 = vadd.f32 %v1459, %v1461
    %v1468 = vadd.f32 %v1467, %v1463
    %v1469 = vadd.f32 %v1468, %v1465
    %v1470 = vrot.slane %v1469, 4
    %v1471 = vadd.f32 %v1469, %v1470
    %v1472 = vrot.slane %v1471, 2
    %v1473 = vadd.f32 %v1471, %v1472
    %v1474 = vrot.slane %v1473, 1
    %v1475 = vadd.f32 %v1473, %v1474
    %v1476 = vadd.f32 %v1460, %v1462
    %v1477 = vadd.f32 %v1476, %v1464
    %v1478 = vadd.f32 %v1477, %v1466
    %v1479 = vrot.slane %v1478, 4
    %v1480 = vadd.f32 %v1478, %v1479
    %v1481 = vrot.slane %v1480, 2
    %v1482 = vadd.f32 %v1480, %v1481
    %v1483 = vrot.slane %v1482, 1
    %v1484 = vadd.f32 %v1482, %v1483
    %v1487 = vcombine.low %v1475, %v1484
    %v1489 = vunpack.c.l.s4 1966171168
    %v1490 = vunpack.c.0.s8 %v1489
    %v1491 = vlaneseq
    %v1492 = vshrl.u32 %v1491, 7
    %v1493 = vsub.s32 %v1490, %v1492
    %v1494 = vrot.slane %v1487, %v1493
    %v1496 = vunpack.c.l.s4 1966171168
    %v1497 = vunpack.c.0.s8 %v1496
    %v1498 = vlaneseq
    %v1499 = vshrl.u32 %v1498, 7
    %v1500 = vsub.s32 %v1497, %v1499
    %v1501 = vrot.slane %v1494, %v1500
    %v1503 = vlaneseq
    %vm1504 = vcmp.ge.s32.totalorder %v1503, 0
    %vm1505 = vcmp.lt.s32.totalorder %v1503, 256
    %vm1506 = vmand %vm1504, %vm1505
    %1507 = vst.msk [vmem:[#allocation9] sm:$0x3] %vm1506, %v1501
    // Predicated region
    $region30: #{tpu_custom_call.1} parent=1 // pred_check
      _
    $region31: #{tpu_custom_call.1} parent=1 // pred_check_branch
      %1509 = sbr.rel (0) target = $region33
    $region32: #{tpu_custom_call.1} parent=1 // pred_region
      %s1511 = ssub.s32 32, 32
      %1512 = vsyncadd [#allocation4], %s1511
      %s1514 = sshll.u32 [#allocation9], 4
      %s1515 = int_to_ptr.vmem [resolvable:$true] %s1514
      %1517 = dma.vmem_to_hbm [thread:$0]  %s1515, 32, %s4, [#allocation4]
    $region33: #{tpu_custom_call.1} parent=1 // pred_fallthru
      _
    // Predicated region
    $region34: #{tpu_custom_call.1} parent=1 // pred_check
      _
    $region35: #{tpu_custom_call.1} parent=1 // pred_check_branch
      %1519 = sbr.rel (0) target = $region37
    $region36: #{tpu_custom_call.1} parent=1 // pred_region
      %1520 = dma.done [#allocation4], 32
    $region37: #{tpu_custom_call.1} parent=1 // pred_fallthru
      _
    %1521 = vsyncpa [#allocation3], 1
    %1522 = vsyncpa [#allocation7], 1
    %1523 = vsyncpa [#allocation4], 1
    %1524 = vsyncpa [#allocation5], 1

</llo_original>
